<compile_context>
chip_gen: v7x
topology: tpu7x:2x2x1
jax: 0.10.0
libtpu: 0.0.40
codegen_flags: <defaults>
</compile_context>

<pallas_src>
import math

import numpy as np
import jax
import jax.numpy as jnp
from jax import lax
from jax.experimental import pallas as pl
from jax.experimental.pallas import tpu as pltpu  # noqa: F401  (kept for TPU-specific tuning hooks)

EPS = 1e-5                      # torch.nn.BatchNorm2d default eps

N_BATCH = 2
H_IN = W_IN = 28
C1, C2 = 5, 10                  # conv1 / conv2 output channels
K = 5                           # conv kernel size
OH1 = OW1 = 24                  # conv1 output spatial
PH1 = PW1 = 12                  # pooled1 spatial
OH2 = OW2 = 8                   # conv2 output spatial
PH2 = PW2 = 4                   # pooled2 spatial
FC1_IN, FC1_OUT, FC2_OUT = 4 * 4 * C2, 100, 10

# lane-block widths of the fused layouts: lanes = (parity, channel, col // 2)
L1 = 2 * C1 * PW1               # 120
L1H = C1 * PW1                  # 60
L2 = 2 * C2 * PW2               # 80
L2H = C2 * PW2                  # 40


# ------------------------------ fused kernel --------------------------------

def fused_kernel(x_ref, w1_ref, a1_ref, gb1_ref, se1_ref, so1_ref,
                 w2_ref, a2_ref, gb2_ref, se2_ref, so2_ref,
                 fc1w_ref, fc1b_ref, fc2w_ref, fc2b_ref, out_ref):
    f32 = jnp.float32

    def bn_relu(z, a_ref, gb_ref):
        # Training-mode BatchNorm from single-pass batch moments.  The tiny
        # (2,L)@(L,L) matmul sums the column-sums within each channel's lane
        # group and broadcasts the result back to every lane of that channel
        # (A = same-channel 0/1 matrix, pre-divided by the per-channel count),
        # so no lane gather / lane re-expansion is ever needed.
        s = jnp.sum(z, axis=0, keepdims=True)
        ss = jnp.sum(z * z, axis=0, keepdims=True)
        mom = jnp.dot(jnp.concatenate([s, ss], axis=0), a_ref[...],
                      preferred_element_type=f32)
        mean = mom[0:1, :]
        var = jnp.maximum(mom[1:2, :] - mean * mean, 0.0)   # clamp 1-pass var
        scale = gb_ref[0:1, :] * lax.rsqrt(var + EPS)
        shift = gb_ref[1:2, :] - mean * scale
        return jnp.maximum(z * scale + shift, 0.0)

    def pool2x2(y, half, se_ref, so_ref):
        # W direction: lanes are (parity, channel, col//2) -> the 2x2 pool's
        # W-max is a plain half-vs-half lane-slice max (no strides).
        # H direction: even/odd row selection via two tiny 0/1 matmuls.
        wmax = jnp.maximum(y[:, 0:half], y[:, half:2 * half])
        return jnp.maximum(
            jnp.dot(se_ref[...], wmax, preferred_element_type=f32),
            jnp.dot(so_ref[...], wmax, preferred_element_type=f32))

    # ---- conv1 (5x5, 1->5): ONE banded MXU matmul (56,28)@(28,600), then 10
    #      shifted slice-adds combine the 5 kernel-row blocks.  Conv bias is
    #      omitted: training-mode BN cancels any per-channel constant.
    y1 = jnp.dot(x_ref[...], w1_ref[...], preferred_element_type=f32)   # (56, 600)
    rows1 = []
    for b in range(N_BATCH):
        acc = y1[b * H_IN:b * H_IN + OH1, 0:L1]
        for i in range(1, K):
            acc = acc + y1[b * H_IN + i:b * H_IN + i + OH1, i * L1:(i + 1) * L1]
        rows1.append(acc)
    z1 = jnp.concatenate(rows1, axis=0)                                  # (48, 120)

    pooled1 = pool2x2(bn_relu(z1, a1_ref, gb1_ref), L1H, se1_ref, so1_ref)  # (24, 60)

    # ---- conv2 (5x5, 5->10): ONE banded MXU matmul (24,60)@(60,400); im2col
    #      over the (c1, w) lane axis is folded into the packed weight matrix.
    y2 = jnp.dot(pooled1, w2_ref[...], preferred_element_type=f32)       # (24, 400)
    rows2 = []
    for b in range(N_BATCH):
        acc = y2[b * PH1:b * PH1 + OH2, 0:L2]
        for i in range(1, K):
            acc = acc + y2[b * PH1 + i:b * PH1 + i + OH2, i * L2:(i + 1) * L2]
        rows2.append(acc)
    z2 = jnp.concatenate(rows2, axis=0)                                  # (16, 80)

    pooled2 = pool2x2(bn_relu(z2, a2_ref, gb2_ref), L2H, se2_ref, so2_ref)  # (8, 40)

    # ---- pool2-flatten (torch NCHW order) + fc1 as ONE (8,40)@(40,400)
    #      matmul followed by 4 row-block adds per batch element.
    g = jnp.dot(pooled2, fc1w_ref[...], preferred_element_type=f32)      # (8, 400)
    hrows = []
    for b in range(N_BATCH):
        acc = g[b * PH2:b * PH2 + 1, 0:FC1_OUT]
        for ph in range(1, PH2):
            acc = acc + g[b * PH2 + ph:b * PH2 + ph + 1,
                          ph * FC1_OUT:(ph + 1) * FC1_OUT]
        hrows.append(acc)
    h1 = jnp.maximum(jnp.concatenate(hrows, axis=0) + fc1b_ref[...], 0.0)  # (2, 100)

    # ---- fc2 + log_softmax(dim=1)
    z = jnp.dot(h1, fc2w_ref[...], preferred_element_type=f32) + fc2b_ref[...]
    z = z - jnp.max(z, axis=1, keepdims=True)
    out_ref[...] = z - jnp.log(jnp.sum(jnp.exp(z), axis=1, keepdims=True))


# ------------------------------ parameters ----------------------------------

def init_params(key):
    # torch-layout parameters matching TorchModel's default init ranges
    ks = jax.random.split(key, 8)

    def u(k, shape, fan_in):
        b = 1.0 / math.sqrt(fan_in)
        return jax.random.uniform(k, shape, jnp.float32, -b, b)

    return {
        "w1": u(ks[0], (C1, 1, K, K), 1 * K * K),
        "b1": u(ks[1], (C1,), 1 * K * K),   # folded out in kernel (BN cancels)
        "bn1_g": jnp.ones((C1,), jnp.float32),
        "bn1_b": jnp.zeros((C1,), jnp.float32),
        "w2": u(ks[2], (C2, C1, K, K), C1 * K * K),
        "b2": u(ks[3], (C2,), C1 * K * K),  # folded out in kernel (BN cancels)
        "bn2_g": jnp.ones((C2,), jnp.float32),
        "bn2_b": jnp.zeros((C2,), jnp.float32),
        "fc1_w": u(ks[4], (FC1_OUT, FC1_IN), FC1_IN),
        "fc1_b": u(ks[5], (FC1_OUT,), FC1_IN),
        "fc2_w": u(ks[6], (FC2_OUT, FC1_OUT), FC1_OUT),
        "fc2_b": u(ks[7], (FC2_OUT,), FC1_OUT),
    }


def pack_params(p):
    """One-time repack of torch-layout weights into kernel-friendly matrices."""
    w1 = np.asarray(p["w1"], np.float32)           # (5,1,5,5)
    w2 = np.asarray(p["w2"], np.float32)           # (10,5,5,5)
    fc1w = np.asarray(p["fc1_w"], np.float32)      # (100,160)
    fc2w = np.asarray(p["fc2_w"], np.float32)      # (10,100)
    g1, be1 = np.asarray(p["bn1_g"], np.float32), np.asarray(p["bn1_b"], np.float32)
    g2, be2 = np.asarray(p["bn2_g"], np.float32), np.asarray(p["bn2_b"], np.float32)

    # conv1 -> banded matrix: column (i, parity, c, ow//2); row = input col w.
    w1cat = np.zeros((W_IN, K * L1), np.float32)
    for i in range(K):
        for par in range(2):
            for c in range(C1):
                for owh in range(PW1):
                    ow = 2 * owh + par
                    col = i * L1 + par * L1H + c * PW1 + owh
                    w1cat[ow:ow + K, col] = w1[c, 0, i, :]

    # conv2 -> banded matrix over the pooled1 (c1, w) lane axis.
    w2cat = np.zeros((C1 * PW1, K * L2), np.float32)
    for i in range(K):
        for par in range(2):
            for c2 in range(C2):
                for owh in range(PW2):
                    ow = 2 * owh + par
                    col = i * L2 + par * L2H + c2 * PW2 + owh
                    for c in range(C1):
                        w2cat[c * PW1 + ow:c * PW1 + ow + K, col] = w2[c2, c, i, :]

    # even/odd output-row selectors for the H direction of the two max-pools.
    se1 = np.zeros((N_BATCH * PH1, N_BATCH * OH1), np.float32)
    so1 = np.zeros_like(se1)
    for b in range(N_BATCH):
        for r in range(PH1):
            se1[b * PH1 + r, b * OH1 + 2 * r] = 1.0
            so1[b * PH1 + r, b * OH1 + 2 * r + 1] = 1.0
    se2 = np.zeros((N_BATCH * PH2, N_BATCH * OH2), np.float32)
    so2 = np.zeros_like(se2)
    for b in range(N_BATCH):
        for r in range(PH2):
            se2[b * PH2 + r, b * OH2 + 2 * r] = 1.0
            so2[b * PH2 + r, b * OH2 + 2 * r + 1] = 1.0

    # BN same-channel indicator matrices (pre-divided by per-channel count)
    # and gamma/beta pre-expanded onto the lane layout.
    ch1 = (np.arange(L1) % L1H) // PW1
    a1 = (ch1[:, None] == ch1[None, :]).astype(np.float32) / (N_BATCH * OH1 * OW1)
    gb1 = np.stack([g1[ch1], be1[ch1]], axis=0)                       # (2,120)
    ch2 = (np.arange(L2) % L2H) // PW2
    a2 = (ch2[:, None] == ch2[None, :]).astype(np.float32) / (N_BATCH * OH2 * OW2)
    gb2 = np.stack([g2[ch2], be2[ch2]], axis=0)                       # (2,80)

    # fc1 rows regrouped so a single (8,40)@(40,400) matmul + 4 row-block adds
    # realises pool2-flatten (torch NCHW order c*16 + h*4 + w) followed by fc1.
    fc1cat = np.zeros((L2H, PH2 * FC1_OUT), np.float32)
    for c2 in range(C2):
        for ph in range(PH2):
            for pw in range(PW2):
                fc1cat[c2 * PW2 + pw, ph * FC1_OUT:(ph + 1) * FC1_OUT] = \
                    fc1w[:, c2 * (PH2 * PW2) + ph * PW2 + pw]

    return {
        "w1cat": jnp.asarray(w1cat), "a1": jnp.asarray(a1), "gb1": jnp.asarray(gb1),
        "se1": jnp.asarray(se1), "so1": jnp.asarray(so1),
        "w2cat": jnp.asarray(w2cat), "a2": jnp.asarray(a2), "gb2": jnp.asarray(gb2),
        "se2": jnp.asarray(se2), "so2": jnp.asarray(so2),
        "fc1cat": jnp.asarray(fc1cat),
        "fc1b": jnp.asarray(np.asarray(p["fc1_b"], np.float32).reshape(1, FC1_OUT)),
        "fc2w": jnp.asarray(fc2w.T),                                  # (100,10)
        "fc2b": jnp.asarray(np.asarray(p["fc2_b"], np.float32).reshape(1, FC2_OUT)),
    }


# ------------------------------- forward ------------------------------------

@jax.jit
def forward(packed, x_nchw):
    n = x_nchw.shape[0]          # must equal N_BATCH (selectors are baked in)
    # C=1 NCHW -> flat (n*28, 28) image stack: metadata-only reshape, no
    # transpose, no strided parity slices, no extra HBM round-trips.
    x2d = jnp.reshape(x_nchw.astype(jnp.float32), (n * H_IN, W_IN))
    # Single-invocation pallas_call: whole arrays live in VMEM (few 100 KiB),
    # so no grid / BlockSpec pipelining is needed.
    # TODO(synk): if batch ever scales up, add a core-parallel batch axis for
    # the v7x second TensorCore and exchange BN partial sums via VMEM_SHARED.
    return pl.pallas_call(
        fused_kernel,
        out_shape=jax.ShapeDtypeStruct((n, FC2_OUT), jnp.float32),
    )(x2d, packed["w1cat"], packed["a1"], packed["gb1"], packed["se1"],
      packed["so1"], packed["w2cat"], packed["a2"], packed["gb2"],
      packed["se2"], packed["so2"], packed["fc1cat"], packed["fc1b"],
      packed["fc2w"], packed["fc2b"])


# --------------------------- pure-JAX reference -----------------------------

def _bn_train(x, g, b):
    mean = jnp.mean(x, axis=(0, 2, 3), keepdims=True)
    var = jnp.mean(jnp.square(x - mean), axis=(0, 2, 3), keepdims=True)
    return (x - mean) * lax.rsqrt(var + EPS) * g[None, :, None, None] + b[None, :, None, None]


def _pool2x2(x):
    return lax.reduce_window(x, -jnp.inf, lax.max, (1, 1, 2, 2), (1, 1, 2, 2), "VALID")


@jax.jit
def reference_forward(params, x):
    hi = lax.Precision.HIGHEST
    dn = ("NCHW", "OIHW", "NCHW")
    x = x.astype(jnp.float32)
    y = lax.conv_general_dilated(x, params["w1"], (1, 1), "VALID",
                                 dimension_numbers=dn, precision=hi)
    y = y + params["b1"][None, :, None, None]
    y = _pool2x2(jnp.maximum(_bn_train(y, params["bn1_g"], params["bn1_b"]), 0.0))
    y = lax.conv_general_dilated(y, params["w2"], (1, 1), "VALID",
                                 dimension_numbers=dn, precision=hi)
    y = y + params["b2"][None, :, None, None]
    y = _pool2x2(jnp.maximum(_bn_train(y, params["bn2_g"], params["bn2_b"]), 0.0))
    y = y.reshape(y.shape[0], -1)
    y = jnp.maximum(jnp.dot(y, params["fc1_w"].T, precision=hi) + params["fc1_b"], 0.0)
    z = jnp.dot(y, params["fc2_w"].T, precision=hi) + params["fc2_b"]
    return jax.nn.log_softmax(z, axis=1)


if __name__ == "__main__":
    key = jax.random.PRNGKey(0)
    pkey, xkey = jax.random.split(key)
    params = init_params(pkey)
    packed = pack_params(params)
    # batch=2, single input channel, 28x28 (the only spatial size consistent
    # with the 4*4*10 flatten in the reference module)
    x = jax.random.normal(xkey, (N_BATCH, 1, H_IN, W_IN), dtype=jnp.float32)

    out = jax.block_until_ready(forward(packed, x))
    assert out.shape == (N_BATCH, FC2_OUT)
    assert bool(jnp.all(jnp.isfinite(out)))
    # log_softmax rows must exponentiate-sum to 1
    assert bool(jnp.allclose(jnp.sum(jnp.exp(out), axis=1), 1.0, atol=1e-5))
    # match the un-fused pure-JAX reference of the torch module
    ref = reference_forward(params, x)
    assert bool(jnp.allclose(out, ref, atol=2e-3, rtol=2e-3)), \
        float(jnp.max(jnp.abs(out - ref)))
    print("KERNEL_OK")
</pallas_src>

<mosaic_0001>
module attributes {stable_mosaic.version = 11 : i64} {
  func.func @fused_kernel(%arg0: memref<56x28xf32, #tpu.memory_space<vmem>>, %arg1: memref<28x600xf32, #tpu.memory_space<vmem>>, %arg2: memref<120x120xf32, #tpu.memory_space<vmem>>, %arg3: memref<2x120xf32, #tpu.memory_space<vmem>>, %arg4: memref<24x48xf32, #tpu.memory_space<vmem>>, %arg5: memref<24x48xf32, #tpu.memory_space<vmem>>, %arg6: memref<60x400xf32, #tpu.memory_space<vmem>>, %arg7: memref<80x80xf32, #tpu.memory_space<vmem>>, %arg8: memref<2x80xf32, #tpu.memory_space<vmem>>, %arg9: memref<8x16xf32, #tpu.memory_space<vmem>>, %arg10: memref<8x16xf32, #tpu.memory_space<vmem>>, %arg11: memref<40x400xf32, #tpu.memory_space<vmem>>, %arg12: memref<1x100xf32, #tpu.memory_space<vmem>>, %arg13: memref<100x10xf32, #tpu.memory_space<vmem>>, %arg14: memref<1x10xf32, #tpu.memory_space<vmem>>, %arg15: memref<2x10xf32, #tpu.memory_space<vmem>>) attributes {dimension_semantics = [], scalar_prefetch = 0 : i64, scratch_operands = 0 : i64, tpu.core_type = #tpu.core_type<tc>} {
    %c0 = arith.constant 0 : index
    %c0_0 = arith.constant 0 : index
    %0 = vector.load %arg0[%c0, %c0_0] : memref<56x28xf32, #tpu.memory_space<vmem>>, vector<56x28xf32>
    %c0_1 = arith.constant 0 : index
    %c0_2 = arith.constant 0 : index
    %1 = vector.load %arg1[%c0_1, %c0_2] : memref<28x600xf32, #tpu.memory_space<vmem>>, vector<28x600xf32>
    %cst = arith.constant dense<0.000000e+00> : vector<56x600xf32>
    %2 = tpu.matmul %0, %1, %cst {dimension_numbers = #tpu.dot_dimension_numbers<[1], [0], [0], [1], [0, 0, 1, 1], [], []>} : vector<56x28xf32>, vector<28x600xf32>, vector<56x600xf32> -> vector<56x600xf32>
    %3 = vector.extract_strided_slice %2 {offsets = [0, 0], sizes = [24, 120], strides = [1, 1]} : vector<56x600xf32> to vector<24x120xf32>
    %4 = vector.extract_strided_slice %2 {offsets = [1, 120], sizes = [24, 120], strides = [1, 1]} : vector<56x600xf32> to vector<24x120xf32>
    %5 = arith.addf %3, %4 : vector<24x120xf32>
    %6 = vector.extract_strided_slice %2 {offsets = [2, 240], sizes = [24, 120], strides = [1, 1]} : vector<56x600xf32> to vector<24x120xf32>
    %7 = arith.addf %5, %6 : vector<24x120xf32>
    %8 = vector.extract_strided_slice %2 {offsets = [3, 360], sizes = [24, 120], strides = [1, 1]} : vector<56x600xf32> to vector<24x120xf32>
    %9 = arith.addf %7, %8 : vector<24x120xf32>
    %10 = vector.extract_strided_slice %2 {offsets = [4, 480], sizes = [24, 120], strides = [1, 1]} : vector<56x600xf32> to vector<24x120xf32>
    %11 = arith.addf %9, %10 : vector<24x120xf32>
    %12 = vector.extract_strided_slice %2 {offsets = [28, 0], sizes = [24, 120], strides = [1, 1]} : vector<56x600xf32> to vector<24x120xf32>
    %13 = vector.extract_strided_slice %2 {offsets = [29, 120], sizes = [24, 120], strides = [1, 1]} : vector<56x600xf32> to vector<24x120xf32>
    %14 = arith.addf %12, %13 : vector<24x120xf32>
    %15 = vector.extract_strided_slice %2 {offsets = [30, 240], sizes = [24, 120], strides = [1, 1]} : vector<56x600xf32> to vector<24x120xf32>
    %16 = arith.addf %14, %15 : vector<24x120xf32>
    %17 = vector.extract_strided_slice %2 {offsets = [31, 360], sizes = [24, 120], strides = [1, 1]} : vector<56x600xf32> to vector<24x120xf32>
    %18 = arith.addf %16, %17 : vector<24x120xf32>
    %19 = vector.extract_strided_slice %2 {offsets = [32, 480], sizes = [24, 120], strides = [1, 1]} : vector<56x600xf32> to vector<24x120xf32>
    %20 = arith.addf %18, %19 : vector<24x120xf32>
    %21 = tpu.concatenate %11, %20 in 0 : vector<24x120xf32>, vector<24x120xf32> -> vector<48x120xf32>
    %cst_3 = arith.constant dense<0.000000e+00> : vector<120xf32>
    %22 = vector.multi_reduction <add>, %21, %cst_3 [0] : vector<48x120xf32> to vector<120xf32>
    %23 = vector.shape_cast %22 : vector<120xf32> to vector<1x120xf32>
    %24 = arith.mulf %21, %21 : vector<48x120xf32>
    %cst_4 = arith.constant dense<0.000000e+00> : vector<120xf32>
    %25 = vector.multi_reduction <add>, %24, %cst_4 [0] : vector<48x120xf32> to vector<120xf32>
    %26 = vector.shape_cast %25 : vector<120xf32> to vector<1x120xf32>
    %27 = tpu.concatenate %23, %26 in 0 : vector<1x120xf32>, vector<1x120xf32> -> vector<2x120xf32>
    %c0_5 = arith.constant 0 : index
    %c0_6 = arith.constant 0 : index
    %28 = vector.load %arg2[%c0_5, %c0_6] : memref<120x120xf32, #tpu.memory_space<vmem>>, vector<120x120xf32>
    %cst_7 = arith.constant dense<0.000000e+00> : vector<2x120xf32>
    %29 = tpu.matmul %27, %28, %cst_7 {dimension_numbers = #tpu.dot_dimension_numbers<[1], [0], [0], [1], [0, 0, 1, 1], [], []>} : vector<2x120xf32>, vector<120x120xf32>, vector<2x120xf32> -> vector<2x120xf32>
    %30 = vector.extract_strided_slice %29 {offsets = [0, 0], sizes = [1, 120], strides = [1, 1]} : vector<2x120xf32> to vector<1x120xf32>
    %31 = vector.extract_strided_slice %29 {offsets = [1, 0], sizes = [1, 120], strides = [1, 1]} : vector<2x120xf32> to vector<1x120xf32>
    %32 = arith.mulf %30, %30 : vector<1x120xf32>
    %33 = arith.subf %31, %32 : vector<1x120xf32>
    %cst_8 = arith.constant 0.000000e+00 : f32
    %34 = vector.broadcast %cst_8 : f32 to vector<1x120xf32>
    %35 = arith.maximumf %33, %34 : vector<1x120xf32>
    %c0_9 = arith.constant 0 : index
    %c0_10 = arith.constant 0 : index
    %36 = vector.load %arg3[%c0_9, %c0_10] : memref<2x120xf32, #tpu.memory_space<vmem>>, vector<1x120xf32>
    %cst_11 = arith.constant 9.99999974E-6 : f32
    %37 = vector.broadcast %cst_11 : f32 to vector<1x120xf32>
    %38 = arith.addf %35, %37 : vector<1x120xf32>
    %39 = math.rsqrt %38 : vector<1x120xf32>
    %40 = arith.mulf %36, %39 : vector<1x120xf32>
    %c1 = arith.constant 1 : index
    %c0_12 = arith.constant 0 : index
    %41 = vector.load %arg3[%c1, %c0_12] : memref<2x120xf32, #tpu.memory_space<vmem>>, vector<1x120xf32>
    %42 = arith.mulf %30, %40 : vector<1x120xf32>
    %43 = arith.subf %41, %42 : vector<1x120xf32>
    %44 = vector.broadcast %40 : vector<1x120xf32> to vector<48x120xf32>
    %45 = arith.mulf %21, %44 : vector<48x120xf32>
    %46 = vector.broadcast %43 : vector<1x120xf32> to vector<48x120xf32>
    %47 = arith.addf %45, %46 : vector<48x120xf32>
    %cst_13 = arith.constant 0.000000e+00 : f32
    %48 = vector.broadcast %cst_13 : f32 to vector<48x120xf32>
    %49 = arith.maximumf %47, %48 : vector<48x120xf32>
    %50 = vector.extract_strided_slice %49 {offsets = [0, 0], sizes = [48, 60], strides = [1, 1]} : vector<48x120xf32> to vector<48x60xf32>
    %51 = vector.extract_strided_slice %49 {offsets = [0, 60], sizes = [48, 60], strides = [1, 1]} : vector<48x120xf32> to vector<48x60xf32>
    %52 = arith.maximumf %50, %51 : vector<48x60xf32>
    %c0_14 = arith.constant 0 : index
    %c0_15 = arith.constant 0 : index
    %53 = vector.load %arg4[%c0_14, %c0_15] : memref<24x48xf32, #tpu.memory_space<vmem>>, vector<24x48xf32>
    %cst_16 = arith.constant dense<0.000000e+00> : vector<24x60xf32>
    %54 = tpu.matmul %53, %52, %cst_16 {dimension_numbers = #tpu.dot_dimension_numbers<[1], [0], [0], [1], [0, 0, 1, 1], [], []>} : vector<24x48xf32>, vector<48x60xf32>, vector<24x60xf32> -> vector<24x60xf32>
    %c0_17 = arith.constant 0 : index
    %c0_18 = arith.constant 0 : index
    %55 = vector.load %arg5[%c0_17, %c0_18] : memref<24x48xf32, #tpu.memory_space<vmem>>, vector<24x48xf32>
    %cst_19 = arith.constant dense<0.000000e+00> : vector<24x60xf32>
    %56 = tpu.matmul %55, %52, %cst_19 {dimension_numbers = #tpu.dot_dimension_numbers<[1], [0], [0], [1], [0, 0, 1, 1], [], []>} : vector<24x48xf32>, vector<48x60xf32>, vector<24x60xf32> -> vector<24x60xf32>
    %57 = arith.maximumf %54, %56 : vector<24x60xf32>
    %c0_20 = arith.constant 0 : index
    %c0_21 = arith.constant 0 : index
    %58 = vector.load %arg6[%c0_20, %c0_21] : memref<60x400xf32, #tpu.memory_space<vmem>>, vector<60x400xf32>
    %cst_22 = arith.constant dense<0.000000e+00> : vector<24x400xf32>
    %59 = tpu.matmul %57, %58, %cst_22 {dimension_numbers = #tpu.dot_dimension_numbers<[1], [0], [0], [1], [0, 0, 1, 1], [], []>} : vector<24x60xf32>, vector<60x400xf32>, vector<24x400xf32> -> vector<24x400xf32>
    %60 = vector.extract_strided_slice %59 {offsets = [0, 0], sizes = [8, 80], strides = [1, 1]} : vector<24x400xf32> to vector<8x80xf32>
    %61 = vector.extract_strided_slice %59 {offsets = [1, 80], sizes = [8, 80], strides = [1, 1]} : vector<24x400xf32> to vector<8x80xf32>
    %62 = arith.addf %60, %61 : vector<8x80xf32>
    %63 = vector.extract_strided_slice %59 {offsets = [2, 160], sizes = [8, 80], strides = [1, 1]} : vector<24x400xf32> to vector<8x80xf32>
    %64 = arith.addf %62, %63 : vector<8x80xf32>
    %65 = vector.extract_strided_slice %59 {offsets = [3, 240], sizes = [8, 80], strides = [1, 1]} : vector<24x400xf32> to vector<8x80xf32>
    %66 = arith.addf %64, %65 : vector<8x80xf32>
    %67 = vector.extract_strided_slice %59 {offsets = [4, 320], sizes = [8, 80], strides = [1, 1]} : vector<24x400xf32> to vector<8x80xf32>
    %68 = arith.addf %66, %67 : vector<8x80xf32>
    %69 = vector.extract_strided_slice %59 {offsets = [12, 0], sizes = [8, 80], strides = [1, 1]} : vector<24x400xf32> to vector<8x80xf32>
    %70 = vector.extract_strided_slice %59 {offsets = [13, 80], sizes = [8, 80], strides = [1, 1]} : vector<24x400xf32> to vector<8x80xf32>
    %71 = arith.addf %69, %70 : vector<8x80xf32>
    %72 = vector.extract_strided_slice %59 {offsets = [14, 160], sizes = [8, 80], strides = [1, 1]} : vector<24x400xf32> to vector<8x80xf32>
    %73 = arith.addf %71, %72 : vector<8x80xf32>
    %74 = vector.extract_strided_slice %59 {offsets = [15, 240], sizes = [8, 80], strides = [1, 1]} : vector<24x400xf32> to vector<8x80xf32>
    %75 = arith.addf %73, %74 : vector<8x80xf32>
    %76 = vector.extract_strided_slice %59 {offsets = [16, 320], sizes = [8, 80], strides = [1, 1]} : vector<24x400xf32> to vector<8x80xf32>
    %77 = arith.addf %75, %76 : vector<8x80xf32>
    %78 = tpu.concatenate %68, %77 in 0 : vector<8x80xf32>, vector<8x80xf32> -> vector<16x80xf32>
    %cst_23 = arith.constant dense<0.000000e+00> : vector<80xf32>
    %79 = vector.multi_reduction <add>, %78, %cst_23 [0] : vector<16x80xf32> to vector<80xf32>
    %80 = vector.shape_cast %79 : vector<80xf32> to vector<1x80xf32>
    %81 = arith.mulf %78, %78 : vector<16x80xf32>
    %cst_24 = arith.constant dense<0.000000e+00> : vector<80xf32>
    %82 = vector.multi_reduction <add>, %81, %cst_24 [0] : vector<16x80xf32> to vector<80xf32>
    %83 = vector.shape_cast %82 : vector<80xf32> to vector<1x80xf32>
    %84 = tpu.concatenate %80, %83 in 0 : vector<1x80xf32>, vector<1x80xf32> -> vector<2x80xf32>
    %c0_25 = arith.constant 0 : index
    %c0_26 = arith.constant 0 : index
    %85 = vector.load %arg7[%c0_25, %c0_26] : memref<80x80xf32, #tpu.memory_space<vmem>>, vector<80x80xf32>
    %cst_27 = arith.constant dense<0.000000e+00> : vector<2x80xf32>
    %86 = tpu.matmul %84, %85, %cst_27 {dimension_numbers = #tpu.dot_dimension_numbers<[1], [0], [0], [1], [0, 0, 1, 1], [], []>} : vector<2x80xf32>, vector<80x80xf32>, vector<2x80xf32> -> vector<2x80xf32>
    %87 = vector.extract_strided_slice %86 {offsets = [0, 0], sizes = [1, 80], strides = [1, 1]} : vector<2x80xf32> to vector<1x80xf32>
    %88 = vector.extract_strided_slice %86 {offsets = [1, 0], sizes = [1, 80], strides = [1, 1]} : vector<2x80xf32> to vector<1x80xf32>
    %89 = arith.mulf %87, %87 : vector<1x80xf32>
    %90 = arith.subf %88, %89 : vector<1x80xf32>
    %cst_28 = arith.constant 0.000000e+00 : f32
    %91 = vector.broadcast %cst_28 : f32 to vector<1x80xf32>
    %92 = arith.maximumf %90, %91 : vector<1x80xf32>
    %c0_29 = arith.constant 0 : index
    %c0_30 = arith.constant 0 : index
    %93 = vector.load %arg8[%c0_29, %c0_30] : memref<2x80xf32, #tpu.memory_space<vmem>>, vector<1x80xf32>
    %cst_31 = arith.constant 9.99999974E-6 : f32
    %94 = vector.broadcast %cst_31 : f32 to vector<1x80xf32>
    %95 = arith.addf %92, %94 : vector<1x80xf32>
    %96 = math.rsqrt %95 : vector<1x80xf32>
    %97 = arith.mulf %93, %96 : vector<1x80xf32>
    %c1_32 = arith.constant 1 : index
    %c0_33 = arith.constant 0 : index
    %98 = vector.load %arg8[%c1_32, %c0_33] : memref<2x80xf32, #tpu.memory_space<vmem>>, vector<1x80xf32>
    %99 = arith.mulf %87, %97 : vector<1x80xf32>
    %100 = arith.subf %98, %99 : vector<1x80xf32>
    %101 = vector.broadcast %97 : vector<1x80xf32> to vector<16x80xf32>
    %102 = arith.mulf %78, %101 : vector<16x80xf32>
    %103 = vector.broadcast %100 : vector<1x80xf32> to vector<16x80xf32>
    %104 = arith.addf %102, %103 : vector<16x80xf32>
    %cst_34 = arith.constant 0.000000e+00 : f32
    %105 = vector.broadcast %cst_34 : f32 to vector<16x80xf32>
    %106 = arith.maximumf %104, %105 : vector<16x80xf32>
    %107 = vector.extract_strided_slice %106 {offsets = [0, 0], sizes = [16, 40], strides = [1, 1]} : vector<16x80xf32> to vector<16x40xf32>
    %108 = vector.extract_strided_slice %106 {offsets = [0, 40], sizes = [16, 40], strides = [1, 1]} : vector<16x80xf32> to vector<16x40xf32>
    %109 = arith.maximumf %107, %108 : vector<16x40xf32>
    %c0_35 = arith.constant 0 : index
    %c0_36 = arith.constant 0 : index
    %110 = vector.load %arg9[%c0_35, %c0_36] : memref<8x16xf32, #tpu.memory_space<vmem>>, vector<8x16xf32>
    %cst_37 = arith.constant dense<0.000000e+00> : vector<8x40xf32>
    %111 = tpu.matmul %110, %109, %cst_37 {dimension_numbers = #tpu.dot_dimension_numbers<[1], [0], [0], [1], [0, 0, 1, 1], [], []>} : vector<8x16xf32>, vector<16x40xf32>, vector<8x40xf32> -> vector<8x40xf32>
    %c0_38 = arith.constant 0 : index
    %c0_39 = arith.constant 0 : index
    %112 = vector.load %arg10[%c0_38, %c0_39] : memref<8x16xf32, #tpu.memory_space<vmem>>, vector<8x16xf32>
    %cst_40 = arith.constant dense<0.000000e+00> : vector<8x40xf32>
    %113 = tpu.matmul %112, %109, %cst_40 {dimension_numbers = #tpu.dot_dimension_numbers<[1], [0], [0], [1], [0, 0, 1, 1], [], []>} : vector<8x16xf32>, vector<16x40xf32>, vector<8x40xf32> -> vector<8x40xf32>
    %114 = arith.maximumf %111, %113 : vector<8x40xf32>
    %c0_41 = arith.constant 0 : index
    %c0_42 = arith.constant 0 : index
    %115 = vector.load %arg11[%c0_41, %c0_42] : memref<40x400xf32, #tpu.memory_space<vmem>>, vector<40x400xf32>
    %cst_43 = arith.constant dense<0.000000e+00> : vector<8x400xf32>
    %116 = tpu.matmul %114, %115, %cst_43 {dimension_numbers = #tpu.dot_dimension_numbers<[1], [0], [0], [1], [0, 0, 1, 1], [], []>} : vector<8x40xf32>, vector<40x400xf32>, vector<8x400xf32> -> vector<8x400xf32>
    %117 = vector.extract_strided_slice %116 {offsets = [0, 0], sizes = [1, 100], strides = [1, 1]} : vector<8x400xf32> to vector<1x100xf32>
    %118 = vector.extract_strided_slice %116 {offsets = [1, 100], sizes = [1, 100], strides = [1, 1]} : vector<8x400xf32> to vector<1x100xf32>
    %119 = arith.addf %117, %118 : vector<1x100xf32>
    %120 = vector.extract_strided_slice %116 {offsets = [2, 200], sizes = [1, 100], strides = [1, 1]} : vector<8x400xf32> to vector<1x100xf32>
    %121 = arith.addf %119, %120 : vector<1x100xf32>
    %122 = vector.extract_strided_slice %116 {offsets = [3, 300], sizes = [1, 100], strides = [1, 1]} : vector<8x400xf32> to vector<1x100xf32>
    %123 = arith.addf %121, %122 : vector<1x100xf32>
    %124 = vector.extract_strided_slice %116 {offsets = [4, 0], sizes = [1, 100], strides = [1, 1]} : vector<8x400xf32> to vector<1x100xf32>
    %125 = vector.extract_strided_slice %116 {offsets = [5, 100], sizes = [1, 100], strides = [1, 1]} : vector<8x400xf32> to vector<1x100xf32>
    %126 = arith.addf %124, %125 : vector<1x100xf32>
    %127 = vector.extract_strided_slice %116 {offsets = [6, 200], sizes = [1, 100], strides = [1, 1]} : vector<8x400xf32> to vector<1x100xf32>
    %128 = arith.addf %126, %127 : vector<1x100xf32>
    %129 = vector.extract_strided_slice %116 {offsets = [7, 300], sizes = [1, 100], strides = [1, 1]} : vector<8x400xf32> to vector<1x100xf32>
    %130 = arith.addf %128, %129 : vector<1x100xf32>
    %131 = tpu.concatenate %123, %130 in 0 : vector<1x100xf32>, vector<1x100xf32> -> vector<2x100xf32>
    %c0_44 = arith.constant 0 : index
    %c0_45 = arith.constant 0 : index
    %132 = vector.load %arg12[%c0_44, %c0_45] : memref<1x100xf32, #tpu.memory_space<vmem>>, vector<1x100xf32>
    %133 = vector.broadcast %132 : vector<1x100xf32> to vector<2x100xf32>
    %134 = arith.addf %131, %133 : vector<2x100xf32>
    %cst_46 = arith.constant 0.000000e+00 : f32
    %135 = vector.broadcast %cst_46 : f32 to vector<2x100xf32>
    %136 = arith.maximumf %134, %135 : vector<2x100xf32>
    %c0_47 = arith.constant 0 : index
    %c0_48 = arith.constant 0 : index
    %137 = vector.load %arg13[%c0_47, %c0_48] : memref<100x10xf32, #tpu.memory_space<vmem>>, vector<100x10xf32>
    %cst_49 = arith.constant dense<0.000000e+00> : vector<2x10xf32>
    %138 = tpu.matmul %136, %137, %cst_49 {dimension_numbers = #tpu.dot_dimension_numbers<[1], [0], [0], [1], [0, 0, 1, 1], [], []>} : vector<2x100xf32>, vector<100x10xf32>, vector<2x10xf32> -> vector<2x10xf32>
    %c0_50 = arith.constant 0 : index
    %c0_51 = arith.constant 0 : index
    %139 = vector.load %arg14[%c0_50, %c0_51] : memref<1x10xf32, #tpu.memory_space<vmem>>, vector<1x10xf32>
    %140 = vector.broadcast %139 : vector<1x10xf32> to vector<2x10xf32>
    %141 = arith.addf %138, %140 : vector<2x10xf32>
    %cst_52 = arith.constant dense<0xFF800000> : vector<2xf32>
    %142 = vector.multi_reduction <maximumf>, %141, %cst_52 [1] : vector<2x10xf32> to vector<2xf32>
    %143 = vector.shape_cast %142 : vector<2xf32> to vector<2x1xf32>
    %144 = vector.broadcast %143 : vector<2x1xf32> to vector<2x10xf32>
    %145 = arith.subf %141, %144 : vector<2x10xf32>
    %146 = math.exp %145 : vector<2x10xf32>
    %cst_53 = arith.constant dense<0.000000e+00> : vector<2xf32>
    %147 = vector.multi_reduction <add>, %146, %cst_53 [1] : vector<2x10xf32> to vector<2xf32>
    %148 = vector.shape_cast %147 : vector<2xf32> to vector<2x1xf32>
    %149 = math.log %148 : vector<2x1xf32>
    %150 = vector.broadcast %149 : vector<2x1xf32> to vector<2x10xf32>
    %151 = arith.subf %145, %150 : vector<2x10xf32>
    %c0_54 = arith.constant 0 : index
    %c0_55 = arith.constant 0 : index
    %152 = vector.load %arg15[%c0_54, %c0_55] : memref<2x10xf32, #tpu.memory_space<vmem>>, vector<2x10xf32>
    tpu.vector_store %arg15[%c0_54, %c0_55], %151 {strides = array<i32>} : memref<2x10xf32, #tpu.memory_space<vmem>>, vector<2x10xf32>,
    return
  }
}

</mosaic_0001>

<llo_original>
// kernel: forward.1
$region0: #{forward.1}
  #allocation0 [shape = 'u32[]', space=smem, size = 0x4, offset = 0x4, fixed_abs, tag = 'smem constant byte address 0x4 - core index']
  #allocation1 [shape = 'u32[144,128]{1,0:T(1,128)}', space=vmem, size = 0x12000, scoped, tag = 'internal scratch']
  %s0 = inlined_call_operand.hbm [shape: f32[56,28], index: 0, kind: input, shape index: {}]
  %s1 = inlined_call_operand.vmem [shape: f32[28,600], index: 1, kind: input, shape index: {}]
  %s2 = inlined_call_operand.hbm [shape: f32[120,120], index: 2, kind: input, shape index: {}]
  %s3 = inlined_call_operand.hbm [shape: f32[2,120], index: 3, kind: input, shape index: {}]
  %s4 = inlined_call_operand.hbm [shape: f32[24,48], index: 4, kind: input, shape index: {}]
  %s5 = inlined_call_operand.hbm [shape: f32[24,48], index: 5, kind: input, shape index: {}]
  %s6 = inlined_call_operand.hbm [shape: f32[60,400], index: 6, kind: input, shape index: {}]
  %s7 = inlined_call_operand.hbm [shape: f32[80,80], index: 7, kind: input, shape index: {}]
  %s8 = inlined_call_operand.hbm [shape: f32[2,80], index: 8, kind: input, shape index: {}]
  %s9 = inlined_call_operand.vmem [shape: f32[8,16], index: 9, kind: input, shape index: {}]
  %s10 = inlined_call_operand.hbm [shape: f32[8,16], index: 10, kind: input, shape index: {}]
  %s11 = inlined_call_operand.hbm [shape: f32[40,400], index: 11, kind: input, shape index: {}]
  %s12 = inlined_call_operand.vmem [shape: f32[1,100], index: 12, kind: input, shape index: {}]
  %s13 = inlined_call_operand.vmem [shape: f32[100,10], index: 13, kind: input, shape index: {}]
  %s14 = inlined_call_operand.hbm [shape: f32[1,10], index: 14, kind: input, shape index: {}]
  %s15 = inlined_call_operand.hbm [shape: f32[2,10], index: 15, kind: output, shape index: {}]
  %s16 = sld [smem:[#allocation0]]
  $region114: #{forward.1} parent=0
    _
  %s18 = ssub.s32 1, %s16
  %s19 = scalar_select 0, %s18, %s16
  $region1: #{forward.1} parent=0
    #allocation2 [shape = 'u8[28672]{0}', space=vmem, size = 0x7000, scoped, tag = 'input window, operand 0, single buffered']
    #allocation3 [shape = 's32[1]{0}', space=sflag, size = 0x4, scoped, tag = 'scoped memory for forward.1']
    #allocation4 [shape = 's32[1]{0}', space=sflag, size = 0x4, scoped, tag = 'scoped memory for forward.1']
    #allocation5 [shape = 'u8[61440]{0}', space=vmem, size = 0xf000, scoped, tag = 'input window, operand 2, single buffered']
    #allocation6 [shape = 's32[1]{0}', space=sflag, size = 0x4, scoped, tag = 'scoped memory for forward.1']
    #allocation7 [shape = 'u8[1024]{0}', space=vmem, size = 0x400, scoped, tag = 'input window, operand 3, single buffered']
    #allocation8 [shape = 'u8[12288]{0}', space=vmem, size = 0x3000, scoped, tag = 'input window, operand 4, single buffered']
    #allocation9 [shape = 's32[1]{0}', space=sflag, size = 0x4, scoped, tag = 'scoped memory for forward.1']
    #allocation10 [shape = 'u8[12288]{0}', space=vmem, size = 0x3000, scoped, tag = 'input window, operand 5, single buffered']
    #allocation11 [shape = 'u8[131072]{0}', space=vmem, size = 0x20000, scoped, tag = 'input window, operand 6, single buffered']
    #allocation12 [shape = 's32[1]{0}', space=sflag, size = 0x4, scoped, tag = 'scoped memory for forward.1']
    #allocation13 [shape = 'u8[40960]{0}', space=vmem, size = 0xa000, scoped, tag = 'input window, operand 7, single buffered']
    #allocation14 [shape = 'u8[1024]{0}', space=vmem, size = 0x400, scoped, tag = 'input window, operand 8, single buffered']
    #allocation15 [shape = 's32[1]{0}', space=sflag, size = 0x4, scoped, tag = 'scoped memory for forward.1']
    #allocation16 [shape = 'u8[4096]{0}', space=vmem, size = 0x1000, scoped, tag = 'input window, operand 10, single buffered']
    #allocation17 [shape = 'u8[81920]{0}', space=vmem, size = 0x14000, scoped, tag = 'input window, operand 11, single buffered']
    #allocation18 [shape = 's32[1]{0}', space=sflag, size = 0x4, scoped, tag = 'scoped memory for forward.1']
    #allocation19 [shape = 'u8[512]{0}', space=vmem, size = 0x400, scoped, tag = 'input window, operand 14, single buffered']
    #allocation20 [shape = 'u8[1024]{0}', space=vmem, size = 0x400, scoped, tag = 'output window, operand 0, single buffered']
    %20 = vsyncpa [#allocation3], 0
    %21 = vsyncpa [#allocation6], 0
    %22 = vsyncpa [#allocation9], 0
    %23 = vsyncpa [#allocation12], 0
    %24 = vsyncpa [#allocation15], 0
    %25 = vsyncpa [#allocation18], 0
    %26 = vsyncpa [#allocation4], 0
    // Predicated region
    $region2: #{forward.1} parent=1 // pred_check
      _
    $region3: #{forward.1} parent=1 // pred_check_branch
      %28 = sbr.rel (0) target = $region5
    $region4: #{forward.1} parent=1 // pred_region
      %s30 = ssub.s32 896, 896
      %31 = vsyncadd [#allocation3], %s30
      %s32 = sshll.u32 [#allocation2], 4
      %s33 = int_to_ptr.vmem [resolvable:$true] %s32
      %38 = dma.hbm_to_vmem [thread:$0]  %s0, 896, %s33, [#allocation3], 128, 128, 8
    $region5: #{forward.1} parent=1 // pred_fallthru
      _
    // Predicated region
    $region6: #{forward.1} parent=1 // pred_check
      _
    $region7: #{forward.1} parent=1 // pred_check_branch
      %40 = sbr.rel (0) target = $region9
    $region8: #{forward.1} parent=1 // pred_region
      _
    $region9: #{forward.1} parent=1 // pred_fallthru
      _
    // Predicated region
    $region10: #{forward.1} parent=1 // pred_check
      _
    $region11: #{forward.1} parent=1 // pred_check_branch
      %42 = sbr.rel (0) target = $region13
    $region12: #{forward.1} parent=1 // pred_region
      %s44 = ssub.s32 1920, 1920
      %45 = vsyncadd [#allocation6], %s44
      %s46 = sshll.u32 [#allocation5], 4
      %s47 = int_to_ptr.vmem [resolvable:$true] %s46
      %52 = dma.hbm_to_vmem [thread:$0]  %s2, 1920, %s47, [#allocation6], 128, 128, 8
    $region13: #{forward.1} parent=1 // pred_fallthru
      _
    // Predicated region
    $region14: #{forward.1} parent=1 // pred_check
      _
    $region15: #{forward.1} parent=1 // pred_check_branch
      %54 = sbr.rel (0) target = $region17
    $region16: #{forward.1} parent=1 // pred_region
      %s56 = ssub.s32 32, 32
      %57 = vsyncadd [#allocation6], %s56
      %s59 = sshll.u32 [#allocation7], 4
      %s60 = int_to_ptr.vmem [resolvable:$true] %s59
      %62 = dma.hbm_to_vmem [thread:$0]  %s3, 32, %s60, [#allocation6]
    $region17: #{forward.1} parent=1 // pred_fallthru
      _
    // Predicated region
    $region18: #{forward.1} parent=1 // pred_check
      _
    $region19: #{forward.1} parent=1 // pred_check_branch
      %64 = sbr.rel (0) target = $region21
    $region20: #{forward.1} parent=1 // pred_region
      %s66 = ssub.s32 384, 384
      %67 = vsyncadd [#allocation9], %s66
      %s68 = sshll.u32 [#allocation8], 4
      %s69 = int_to_ptr.vmem [resolvable:$true] %s68
      %74 = dma.hbm_to_vmem [thread:$0]  %s4, 384, %s69, [#allocation9], 128, 128, 8
    $region21: #{forward.1} parent=1 // pred_fallthru
      _
    // Predicated region
    $region22: #{forward.1} parent=1 // pred_check
      _
    $region23: #{forward.1} parent=1 // pred_check_branch
      %76 = sbr.rel (0) target = $region25
    $region24: #{forward.1} parent=1 // pred_region
      %s78 = ssub.s32 384, 384
      %79 = vsyncadd [#allocation9], %s78
      %s80 = sshll.u32 [#allocation10], 4
      %s81 = int_to_ptr.vmem [resolvable:$true] %s80
      %86 = dma.hbm_to_vmem [thread:$0]  %s5, 384, %s81, [#allocation9], 128, 128, 8
    $region25: #{forward.1} parent=1 // pred_fallthru
      _
    // Predicated region
    $region26: #{forward.1} parent=1 // pred_check
      _
    $region27: #{forward.1} parent=1 // pred_check_branch
      %88 = sbr.rel (0) target = $region29
    $region28: #{forward.1} parent=1 // pred_region
      %s90 = ssub.s32 4096, 4096
      %91 = vsyncadd [#allocation12], %s90
      %s92 = sshll.u32 [#allocation11], 4
      %s93 = int_to_ptr.vmem [resolvable:$true] %s92
      %98 = dma.hbm_to_vmem [thread:$0]  %s6, 4096, %s93, [#allocation12], 512, 512, 32
    $region29: #{forward.1} parent=1 // pred_fallthru
      _
    // Predicated region
    $region30: #{forward.1} parent=1 // pred_check
      _
    $region31: #{forward.1} parent=1 // pred_check_branch
      %100 = sbr.rel (0) target = $region33
    $region32: #{forward.1} parent=1 // pred_region
      %s102 = ssub.s32 1280, 1280
      %103 = vsyncadd [#allocation12], %s102
      %s104 = sshll.u32 [#allocation13], 4
      %s105 = int_to_ptr.vmem [resolvable:$true] %s104
      %110 = dma.hbm_to_vmem [thread:$0]  %s7, 1280, %s105, [#allocation12], 128, 128, 8
    $region33: #{forward.1} parent=1 // pred_fallthru
      _
    // Predicated region
    $region34: #{forward.1} parent=1 // pred_check
      _
    $region35: #{forward.1} parent=1 // pred_check_branch
      %112 = sbr.rel (0) target = $region37
    $region36: #{forward.1} parent=1 // pred_region
      %s114 = ssub.s32 32, 32
      %115 = vsyncadd [#allocation15], %s114
      %s117 = sshll.u32 [#allocation14], 4
      %s118 = int_to_ptr.vmem [resolvable:$true] %s117
      %120 = dma.hbm_to_vmem [thread:$0]  %s8, 32, %s118, [#allocation15]
    $region37: #{forward.1} parent=1 // pred_fallthru
      _
    // Predicated region
    $region38: #{forward.1} parent=1 // pred_check
      _
    $region39: #{forward.1} parent=1 // pred_check_branch
      %122 = sbr.rel (0) target = $region41
    $region40: #{forward.1} parent=1 // pred_region
      _
    $region41: #{forward.1} parent=1 // pred_fallthru
      _
    // Predicated region
    $region42: #{forward.1} parent=1 // pred_check
      _
    $region43: #{forward.1} parent=1 // pred_check_branch
      %124 = sbr.rel (0) target = $region45
    $region44: #{forward.1} parent=1 // pred_region
      %s126 = ssub.s32 128, 128
      %127 = vsyncadd [#allocation15], %s126
      %s129 = sshll.u32 [#allocation16], 4
      %s130 = int_to_ptr.vmem [resolvable:$true] %s129
      %132 = dma.hbm_to_vmem [thread:$0]  %s10, 128, %s130, [#allocation15]
    $region45: #{forward.1} parent=1 // pred_fallthru
      _
    // Predicated region
    $region46: #{forward.1} parent=1 // pred_check
      _
    $region47: #{forward.1} parent=1 // pred_check_branch
      %134 = sbr.rel (0) target = $region49
    $region48: #{forward.1} parent=1 // pred_region
      %s136 = ssub.s32 2560, 2560
      %137 = vsyncadd [#allocation18], %s136
      %s138 = sshll.u32 [#allocation17], 4
      %s139 = int_to_ptr.vmem [resolvable:$true] %s138
      %144 = dma.hbm_to_vmem [thread:$0]  %s11, 2560, %s139, [#allocation18], 512, 512, 32
    $region49: #{forward.1} parent=1 // pred_fallthru
      _
    // Predicated region
    $region50: #{forward.1} parent=1 // pred_check
      _
    $region51: #{forward.1} parent=1 // pred_check_branch
      %146 = sbr.rel (0) target = $region53
    $region52: #{forward.1} parent=1 // pred_region
      _
    $region53: #{forward.1} parent=1 // pred_fallthru
      _
    // Predicated region
    $region54: #{forward.1} parent=1 // pred_check
      _
    $region55: #{forward.1} parent=1 // pred_check_branch
      %148 = sbr.rel (0) target = $region57
    $region56: #{forward.1} parent=1 // pred_region
      _
    $region57: #{forward.1} parent=1 // pred_fallthru
      _
    // Predicated region
    $region58: #{forward.1} parent=1 // pred_check
      _
    $region59: #{forward.1} parent=1 // pred_check_branch
      %150 = sbr.rel (0) target = $region61
    $region60: #{forward.1} parent=1 // pred_region
      %s152 = ssub.s32 16, 16
      %153 = vsyncadd [#allocation18], %s152
      %s155 = sshll.u32 [#allocation19], 4
      %s156 = int_to_ptr.vmem [resolvable:$true] %s155
      %158 = dma.hbm_to_vmem [thread:$0]  %s14, 16, %s156, [#allocation18]
    $region61: #{forward.1} parent=1 // pred_fallthru
      _
    // Predicated region
    $region62: #{forward.1} parent=1 // pred_check
      _
    $region63: #{forward.1} parent=1 // pred_check_branch
      %160 = sbr.rel (0) target = $region65
    $region64: #{forward.1} parent=1 // pred_region
      %161 = dma.done [#allocation3], 896
    $region65: #{forward.1} parent=1 // pred_fallthru
      _
    // Predicated region
    $region66: #{forward.1} parent=1 // pred_check
      _
    $region67: #{forward.1} parent=1 // pred_check_branch
      %163 = sbr.rel (0) target = $region69
    $region68: #{forward.1} parent=1 // pred_region
      %164 = dma.done [#allocation6], 1920
    $region69: #{forward.1} parent=1 // pred_fallthru
      _
    // Predicated region
    $region70: #{forward.1} parent=1 // pred_check
      _
    $region71: #{forward.1} parent=1 // pred_check_branch
      %166 = sbr.rel (0) target = $region73
    $region72: #{forward.1} parent=1 // pred_region
      %167 = dma.done [#allocation6], 32
    $region73: #{forward.1} parent=1 // pred_fallthru
      _
    // Predicated region
    $region74: #{forward.1} parent=1 // pred_check
      _
    $region75: #{forward.1} parent=1 // pred_check_branch
      %169 = sbr.rel (0) target = $region77
    $region76: #{forward.1} parent=1 // pred_region
      %170 = dma.done [#allocation9], 384
    $region77: #{forward.1} parent=1 // pred_fallthru
      _
    // Predicated region
    $region78: #{forward.1} parent=1 // pred_check
      _
    $region79: #{forward.1} parent=1 // pred_check_branch
      %172 = sbr.rel (0) target = $region81
    $region80: #{forward.1} parent=1 // pred_region
      %173 = dma.done [#allocation9], 384
    $region81: #{forward.1} parent=1 // pred_fallthru
      _
    // Predicated region
    $region82: #{forward.1} parent=1 // pred_check
      _
    $region83: #{forward.1} parent=1 // pred_check_branch
      %175 = sbr.rel (0) target = $region85
    $region84: #{forward.1} parent=1 // pred_region
      %176 = dma.done [#allocation12], 4096
    $region85: #{forward.1} parent=1 // pred_fallthru
      _
    // Predicated region
    $region86: #{forward.1} parent=1 // pred_check
      _
    $region87: #{forward.1} parent=1 // pred_check_branch
      %178 = sbr.rel (0) target = $region89
    $region88: #{forward.1} parent=1 // pred_region
      %179 = dma.done [#allocation12], 1280
    $region89: #{forward.1} parent=1 // pred_fallthru
      _
    // Predicated region
    $region90: #{forward.1} parent=1 // pred_check
      _
    $region91: #{forward.1} parent=1 // pred_check_branch
      %181 = sbr.rel (0) target = $region93
    $region92: #{forward.1} parent=1 // pred_region
      %182 = dma.done [#allocation15], 32
    $region93: #{forward.1} parent=1 // pred_fallthru
      _
    // Predicated region
    $region94: #{forward.1} parent=1 // pred_check
      _
    $region95: #{forward.1} parent=1 // pred_check_branch
      %184 = sbr.rel (0) target = $region97
    $region96: #{forward.1} parent=1 // pred_region
      %185 = dma.done [#allocation15], 128
    $region97: #{forward.1} parent=1 // pred_fallthru
      _
    // Predicated region
    $region98: #{forward.1} parent=1 // pred_check
      _
    $region99: #{forward.1} parent=1 // pred_check_branch
      %187 = sbr.rel (0) target = $region101
    $region100: #{forward.1} parent=1 // pred_region
      %188 = dma.done [#allocation18], 2560
    $region101: #{forward.1} parent=1 // pred_fallthru
      _
    // Predicated region
    $region102: #{forward.1} parent=1 // pred_check
      _
    $region103: #{forward.1} parent=1 // pred_check_branch
      %190 = sbr.rel (0) target = $region105
    $region104: #{forward.1} parent=1 // pred_region
      %191 = dma.done [#allocation18], 16
    $region105: #{forward.1} parent=1 // pred_fallthru
      _
    %v192 = vld [vmem:[#allocation2] sm:$0xff]
    %v193 = vld [vmem:[#allocation2 + $0x8] sm:$0xff]
    %v194 = vld [vmem:[#allocation2 + $0x10] sm:$0xff]
    %v195 = vld [vmem:[#allocation2 + $0x18] sm:$0xff]
    %v196 = vld [vmem:[#allocation2 + $0x20] sm:$0xff]
    %v197 = vld [vmem:[#allocation2 + $0x28] sm:$0xff]
    %v198 = vld [vmem:[#allocation2 + $0x30] sm:$0xff]
    %v199 = vld [vmem:[%s1] sm:$0xff]
    %v200 = vld [vmem:[%s1 + $0x8] sm:$0xff]
    %v201 = vld [vmem:[%s1 + $0x10] sm:$0xff]
    %v202 = vld [vmem:[%s1 + $0x18] sm:$0xff]
    %v203 = vld [vmem:[%s1 + $0x20] sm:$0xff]
    %v204 = vld [vmem:[%s1 + $0x28] sm:$0xff]
    %v205 = vld [vmem:[%s1 + $0x30] sm:$0xff]
    %v206 = vld [vmem:[%s1 + $0x38] sm:$0xff]
    %v207 = vld [vmem:[%s1 + $0x40] sm:$0xff]
    %v208 = vld [vmem:[%s1 + $0x48] sm:$0xff]
    %v209 = vld [vmem:[%s1 + $0x50] sm:$0xff]
    %v210 = vld [vmem:[%s1 + $0x58] sm:$0xff]
    %v211 = vld [vmem:[%s1 + $0x60] sm:$0xff]
    %v212 = vld [vmem:[%s1 + $0x68] sm:$0xff]
    %v213 = vld [vmem:[%s1 + $0x70] sm:$0xff]
    %v214 = vld [vmem:[%s1 + $0x78] sm:$0xf]
    %v215 = vld [vmem:[%s1 + $0x80] sm:$0xf]
    %v216 = vld [vmem:[%s1 + $0x88] sm:$0xf]
    %v217 = vld [vmem:[%s1 + $0x90] sm:$0xf]
    %v218 = vld [vmem:[%s1 + $0x98] sm:$0xf]
    %vm219 = vcmask 228352
    %v221 = vsel %vm219, %v192, 0
    %v224 = vsel %vm219, %v193, 0
    %v227 = vsel %vm219, %v194, 0
    %v230 = vsel %vm219, %v195, 0
    %v233 = vsel %vm219, %v196, 0
    %v236 = vsel %vm219, %v197, 0
    %v239 = vsel %vm219, %v198, 0
    %vm241 = vcmask 1043456
    %v243 = vsel %vm241, %v214, 0
    %v246 = vsel %vm241, %v215, 0
    %v249 = vsel %vm241, %v216, 0
    %v252 = vsel %vm241, %v217, 0
    %v255 = vsel %vm241, %v218, 0
    %257 = vmatprep.subr.mxu0 %v200
    %258 = vmatpush1.msra.mxu0 %v199
    %259 = vmatprep.subr.mxu0 %v205
    %260 = vmatpush1.msra.mxu0 %v204
    %261 = vmatprep.subr.mxu0 %v210
    %262 = vmatpush1.msra.mxu0 %v209
    %263 = vmatprep.subr.mxu0 %v246
    %264 = vmatpush1.msra.mxu0 %v243
    %265 = vmatprep.subr.mxu0 0.0
    %266 = vmatpush1.msra.mxu0 0.0
    %267 = vmatprep.subr.mxu0 0.0
    %268 = vmatpush1.msra.mxu0 0.0
    %269 = vmatprep.subr.mxu0 0.0
    %270 = vmatpush1.msra.mxu0 0.0
    %271 = vmatprep.subr.mxu0 0.0
    %272 = vmatpush1.msra.mxu0 0.0
    %273 = vmatprep.subr.mxu0 0.0
    %274 = vmatpush1.msra.mxu0 0.0
    %275 = vmatprep.subr.mxu0 0.0
    %276 = vmatpush1.msra.mxu0 0.0
    %277 = vmatprep.subr.mxu0 0.0
    %278 = vmatpush1.msra.mxu0 0.0
    %279 = vmatprep.subr.mxu0 0.0
    %280 = vmatpush1.msra.mxu0 0.0
    %281 = vmatprep.subr.mxu0 0.0
    %282 = vmatpush1.msra.mxu0 0.0
    %283 = vmatprep.subr.mxu0 0.0
    %284 = vmatpush1.msra.mxu0 0.0
    %285 = vmatprep.subr.mxu0 0.0
    %286 = vmatpush1.msra.mxu0 0.0
    %287 = vmatprep.subr.mxu0 0.0
    %288 = vmatpush1.msra.mxu0 0.0
    %289 = vmatprep.subr.mxu0 0.0
    %290 = vmatpush1.msra.mxu0 0.0
    %291 = vmatprep.subr.mxu0 0.0
    %292 = vmatpush1.msra.mxu0 0.0
    %293 = vmatprep.subr.mxu0 0.0
    %294 = vmatpush1.msra.mxu0 0.0
    %295 = vmatprep.subr.mxu0 0.0
    %296 = vmatpush1.msra.mxu0 0.0
    %297 = vmatprep.subr.mxu0 0.0
    %298 = vmatpush1.msra.mxu0 0.0
    %299 = vmatprep.subr.mxu0 0.0
    %300 = vmatpush1.msra.mxu0 0.0
    %301 = vmatprep.subr.mxu0 0.0
    %302 = vmatpush1.msra.mxu0 0.0
    %303 = vmatprep.subr.mxu0 0.0
    %304 = vmatpush1.msra.mxu0 0.0
    %305 = vmatprep.subr.mxu0 0.0
    %306 = vmatpush1.msra.mxu0 0.0
    %307 = vmatprep.subr.mxu0 0.0
    %308 = vmatpush1.msra.mxu0 0.0
    %309 = vmatprep.subr.mxu0 0.0
    %310 = vmatpush1.msra.mxu0 0.0
    %311 = vmatprep.subr.mxu0 0.0
    %312 = vmatpush1.msra.mxu0 0.0
    %313 = vmatprep.subr.mxu0 0.0
    %314 = vmatpush1.msra.mxu0 0.0
    %315 = vmatprep.subr.mxu0 0.0
    %316 = vmatpush1.msra.mxu0 0.0
    %317 = vmatprep.subr.mxu0 0.0
    %318 = vmatpush1.msra.mxu0 0.0
    %319 = vmatprep.subr.mxu0 0.0
    %320 = vmatpush1.msra.mxu0 0.0
    %321 = vmatprep.mubr.f32.mxu0 0.0
    %322 = vmatmul.mubr.f32.gmra.mrb[0].mxu0 %v221
    %v323 = vpop.f32.mrb[0].mxu0
    %v324 = vadd.f32 0.0, %v323
    %v325 = vpop.f32.mrb[0].mxu0
    %v326 = vadd.f32 0.0, %v325
    %327 = vmatprep.mubr.f32.mxu0 0.0
    %328 = vmatmul.mubr.f32.gmra.mrb[0].mxu0 %v224
    %v329 = vpop.f32.mrb[0].mxu0
    %v330 = vadd.f32 0.0, %v329
    %v331 = vpop.f32.mrb[0].mxu0
    %v332 = vadd.f32 0.0, %v331
    %333 = vmatprep.mubr.f32.mxu0 0.0
    %334 = vmatmul.mubr.f32.gmra.mrb[0].mxu0 %v227
    %v335 = vpop.f32.mrb[0].mxu0
    %v336 = vadd.f32 0.0, %v335
    %v337 = vpop.f32.mrb[0].mxu0
    %v338 = vadd.f32 0.0, %v337
    %339 = vmatprep.mubr.f32.mxu0 0.0
    %340 = vmatmul.mubr.f32.gmra.mrb[0].mxu0 %v230
    %v341 = vpop.f32.mrb[0].mxu0
    %v342 = vadd.f32 0.0, %v341
    %v343 = vpop.f32.mrb[0].mxu0
    %v344 = vadd.f32 0.0, %v343
    %345 = vmatprep.mubr.f32.mxu0 0.0
    %346 = vmatmul.mubr.f32.gmra.mrb[0].mxu0 %v233
    %v347 = vpop.f32.mrb[0].mxu0
    %v348 = vadd.f32 0.0, %v347
    %v349 = vpop.f32.mrb[0].mxu0
    %v350 = vadd.f32 0.0, %v349
    %351 = vmatprep.mubr.f32.mxu0 0.0
    %352 = vmatmul.mubr.f32.gmra.mrb[0].mxu0 %v236
    %v353 = vpop.f32.mrb[0].mxu0
    %v354 = vadd.f32 0.0, %v353
    %v355 = vpop.f32.mrb[0].mxu0
    %v356 = vadd.f32 0.0, %v355
    %357 = vmatprep.mubr.f32.mxu0 0.0
    %358 = vmatmul.mubr.f32.gmra.mrb[0].mxu0 %v239
    %v359 = vpop.f32.mrb[0].mxu0
    %v360 = vadd.f32 0.0, %v359
    %v361 = vpop.f32.mrb[0].mxu0
    %v362 = vadd.f32 0.0, %v361
    %363 = vdwg.mxu0
    %364 = vmatprep.subr.mxu0 %v202
    %365 = vmatpush1.msra.mxu0 %v201
    %366 = vmatprep.subr.mxu0 %v207
    %367 = vmatpush1.msra.mxu0 %v206
    %368 = vmatprep.subr.mxu0 %v212
    %369 = vmatpush1.msra.mxu0 %v211
    %370 = vmatprep.subr.mxu0 %v252
    %371 = vmatpush1.msra.mxu0 %v249
    %372 = vmatprep.subr.mxu0 0.0
    %373 = vmatpush1.msra.mxu0 0.0
    %374 = vmatprep.subr.mxu0 0.0
    %375 = vmatpush1.msra.mxu0 0.0
    %376 = vmatprep.subr.mxu0 0.0
    %377 = vmatpush1.msra.mxu0 0.0
    %378 = vmatprep.subr.mxu0 0.0
    %379 = vmatpush1.msra.mxu0 0.0
    %380 = vmatprep.subr.mxu0 0.0
    %381 = vmatpush1.msra.mxu0 0.0
    %382 = vmatprep.subr.mxu0 0.0
    %383 = vmatpush1.msra.mxu0 0.0
    %384 = vmatprep.subr.mxu0 0.0
    %385 = vmatpush1.msra.mxu0 0.0
    %386 = vmatprep.subr.mxu0 0.0
    %387 = vmatpush1.msra.mxu0 0.0
    %388 = vmatprep.subr.mxu0 0.0
    %389 = vmatpush1.msra.mxu0 0.0
    %390 = vmatprep.subr.mxu0 0.0
    %391 = vmatpush1.msra.mxu0 0.0
    %392 = vmatprep.subr.mxu0 0.0
    %393 = vmatpush1.msra.mxu0 0.0
    %394 = vmatprep.subr.mxu0 0.0
    %395 = vmatpush1.msra.mxu0 0.0
    %396 = vmatprep.subr.mxu0 0.0
    %397 = vmatpush1.msra.mxu0 0.0
    %398 = vmatprep.subr.mxu0 0.0
    %399 = vmatpush1.msra.mxu0 0.0
    %400 = vmatprep.subr.mxu0 0.0
    %401 = vmatpush1.msra.mxu0 0.0
    %402 = vmatprep.subr.mxu0 0.0
    %403 = vmatpush1.msra.mxu0 0.0
    %404 = vmatprep.subr.mxu0 0.0
    %405 = vmatpush1.msra.mxu0 0.0
    %406 = vmatprep.subr.mxu0 0.0
    %407 = vmatpush1.msra.mxu0 0.0
    %408 = vmatprep.subr.mxu0 0.0
    %409 = vmatpush1.msra.mxu0 0.0
    %410 = vmatprep.subr.mxu0 0.0
    %411 = vmatpush1.msra.mxu0 0.0
    %412 = vmatprep.subr.mxu0 0.0
    %413 = vmatpush1.msra.mxu0 0.0
    %414 = vmatprep.subr.mxu0 0.0
    %415 = vmatpush1.msra.mxu0 0.0
    %416 = vmatprep.subr.mxu0 0.0
    %417 = vmatpush1.msra.mxu0 0.0
    %418 = vmatprep.subr.mxu0 0.0
    %419 = vmatpush1.msra.mxu0 0.0
    %420 = vmatprep.subr.mxu0 0.0
    %421 = vmatpush1.msra.mxu0 0.0
    %422 = vmatprep.subr.mxu0 0.0
    %423 = vmatpush1.msra.mxu0 0.0
    %424 = vmatprep.subr.mxu0 0.0
    %425 = vmatpush1.msra.mxu0 0.0
    %426 = vmatprep.subr.mxu0 0.0
    %427 = vmatpush1.msra.mxu0 0.0
    %428 = vmatprep.mubr.f32.mxu0 0.0
    %429 = vmatmul.mubr.f32.gmra.mrb[0].mxu0 %v221
    %v430 = vpop.f32.mrb[0].mxu0
    %v431 = vadd.f32 0.0, %v430
    %v432 = vpop.f32.mrb[0].mxu0
    %v433 = vadd.f32 0.0, %v432
    %434 = vmatprep.mubr.f32.mxu0 0.0
    %435 = vmatmul.mubr.f32.gmra.mrb[0].mxu0 %v224
    %v436 = vpop.f32.mrb[0].mxu0
    %v437 = vadd.f32 0.0, %v436
    %v438 = vpop.f32.mrb[0].mxu0
    %v439 = vadd.f32 0.0, %v438
    %440 = vmatprep.mubr.f32.mxu0 0.0
    %441 = vmatmul.mubr.f32.gmra.mrb[0].mxu0 %v227
    %v442 = vpop.f32.mrb[0].mxu0
    %v443 = vadd.f32 0.0, %v442
    %v444 = vpop.f32.mrb[0].mxu0
    %v445 = vadd.f32 0.0, %v444
    %446 = vmatprep.mubr.f32.mxu0 0.0
    %447 = vmatmul.mubr.f32.gmra.mrb[0].mxu0 %v230
    %v448 = vpop.f32.mrb[0].mxu0
    %v449 = vadd.f32 0.0, %v448
    %v450 = vpop.f32.mrb[0].mxu0
    %v451 = vadd.f32 0.0, %v450
    %452 = vmatprep.mubr.f32.mxu0 0.0
    %453 = vmatmul.mubr.f32.gmra.mrb[0].mxu0 %v233
    %v454 = vpop.f32.mrb[0].mxu0
    %v455 = vadd.f32 0.0, %v454
    %v456 = vpop.f32.mrb[0].mxu0
    %v457 = vadd.f32 0.0, %v456
    %458 = vmatprep.mubr.f32.mxu0 0.0
    %459 = vmatmul.mubr.f32.gmra.mrb[0].mxu0 %v236
    %v460 = vpop.f32.mrb[0].mxu0
    %v461 = vadd.f32 0.0, %v460
    %v462 = vpop.f32.mrb[0].mxu0
    %v463 = vadd.f32 0.0, %v462
    %464 = vmatprep.mubr.f32.mxu0 0.0
    %465 = vmatmul.mubr.f32.gmra.mrb[0].mxu0 %v239
    %v466 = vpop.f32.mrb[0].mxu0
    %v467 = vadd.f32 0.0, %v466
    %v468 = vpop.f32.mrb[0].mxu0
    %v469 = vadd.f32 0.0, %v468
    %470 = vdwg.mxu0
    %471 = vmatprep.subr.mxu0 0.0
    %472 = vmatpush1.msra.mxu0 %v203
    %473 = vmatprep.subr.mxu0 0.0
    %474 = vmatpush1.msra.mxu0 %v208
    %475 = vmatprep.subr.mxu0 0.0
    %476 = vmatpush1.msra.mxu0 %v213
    %477 = vmatprep.subr.mxu0 0.0
    %478 = vmatpush1.msra.mxu0 %v255
    %479 = vmatprep.subr.mxu0 0.0
    %480 = vmatpush1.msra.mxu0 0.0
    %481 = vmatprep.subr.mxu0 0.0
    %482 = vmatpush1.msra.mxu0 0.0
    %483 = vmatprep.subr.mxu0 0.0
    %484 = vmatpush1.msra.mxu0 0.0
    %485 = vmatprep.subr.mxu0 0.0
    %486 = vmatpush1.msra.mxu0 0.0
    %487 = vmatprep.subr.mxu0 0.0
    %488 = vmatpush1.msra.mxu0 0.0
    %489 = vmatprep.subr.mxu0 0.0
    %490 = vmatpush1.msra.mxu0 0.0
    %491 = vmatprep.subr.mxu0 0.0
    %492 = vmatpush1.msra.mxu0 0.0
    %493 = vmatprep.subr.mxu0 0.0
    %494 = vmatpush1.msra.mxu0 0.0
    %495 = vmatprep.subr.mxu0 0.0
    %496 = vmatpush1.msra.mxu0 0.0
    %497 = vmatprep.subr.mxu0 0.0
    %498 = vmatpush1.msra.mxu0 0.0
    %499 = vmatprep.subr.mxu0 0.0
    %500 = vmatpush1.msra.mxu0 0.0
    %501 = vmatprep.subr.mxu0 0.0
    %502 = vmatpush1.msra.mxu0 0.0
    %503 = vmatprep.subr.mxu0 0.0
    %504 = vmatpush1.msra.mxu0 0.0
    %505 = vmatprep.subr.mxu0 0.0
    %506 = vmatpush1.msra.mxu0 0.0
    %507 = vmatprep.subr.mxu0 0.0
    %508 = vmatpush1.msra.mxu0 0.0
    %509 = vmatprep.subr.mxu0 0.0
    %510 = vmatpush1.msra.mxu0 0.0
    %511 = vmatprep.subr.mxu0 0.0
    %512 = vmatpush1.msra.mxu0 0.0
    %513 = vmatprep.subr.mxu0 0.0
    %514 = vmatpush1.msra.mxu0 0.0
    %515 = vmatprep.subr.mxu0 0.0
    %516 = vmatpush1.msra.mxu0 0.0
    %517 = vmatprep.subr.mxu0 0.0
    %518 = vmatpush1.msra.mxu0 0.0
    %519 = vmatprep.subr.mxu0 0.0
    %520 = vmatpush1.msra.mxu0 0.0
    %521 = vmatprep.subr.mxu0 0.0
    %522 = vmatpush1.msra.mxu0 0.0
    %523 = vmatprep.subr.mxu0 0.0
    %524 = vmatpush1.msra.mxu0 0.0
    %525 = vmatprep.subr.mxu0 0.0
    %526 = vmatpush1.msra.mxu0 0.0
    %527 = vmatprep.subr.mxu0 0.0
    %528 = vmatpush1.msra.mxu0 0.0
    %529 = vmatprep.subr.mxu0 0.0
    %530 = vmatpush1.msra.mxu0 0.0
    %531 = vmatprep.subr.mxu0 0.0
    %532 = vmatpush1.msra.mxu0 0.0
    %533 = vmatprep.subr.mxu0 0.0
    %534 = vmatpush1.msra.mxu0 0.0
    %535 = vmatprep.mubr.f32.mxu0 0.0
    %536 = vmatmul.mubr.f32.gmra.mrb[0].mxu0 %v221
    %v537 = vpop.f32.mrb[0].mxu0
    %v538 = vadd.f32 0.0, %v537
    %v539 = vpop.f32.mrb[0].mxu0
    %540 = vmatprep.mubr.f32.mxu0 0.0
    %541 = vmatmul.mubr.f32.gmra.mrb[0].mxu0 %v224
    %v542 = vpop.f32.mrb[0].mxu0
    %v543 = vadd.f32 0.0, %v542
    %v544 = vpop.f32.mrb[0].mxu0
    %545 = vmatprep.mubr.f32.mxu0 0.0
    %546 = vmatmul.mubr.f32.gmra.mrb[0].mxu0 %v227
    %v547 = vpop.f32.mrb[0].mxu0
    %v548 = vadd.f32 0.0, %v547
    %v549 = vpop.f32.mrb[0].mxu0
    %550 = vmatprep.mubr.f32.mxu0 0.0
    %551 = vmatmul.mubr.f32.gmra.mrb[0].mxu0 %v230
    %v552 = vpop.f32.mrb[0].mxu0
    %v553 = vadd.f32 0.0, %v552
    %v554 = vpop.f32.mrb[0].mxu0
    %555 = vmatprep.mubr.f32.mxu0 0.0
    %556 = vmatmul.mubr.f32.gmra.mrb[0].mxu0 %v233
    %v557 = vpop.f32.mrb[0].mxu0
    %v558 = vadd.f32 0.0, %v557
    %v559 = vpop.f32.mrb[0].mxu0
    %560 = vmatprep.mubr.f32.mxu0 0.0
    %561 = vmatmul.mubr.f32.gmra.mrb[0].mxu0 %v236
    %v562 = vpop.f32.mrb[0].mxu0
    %v563 = vadd.f32 0.0, %v562
    %v564 = vpop.f32.mrb[0].mxu0
    %565 = vmatprep.mubr.f32.mxu0 0.0
    %566 = vmatmul.mubr.f32.gmra.mrb[0].mxu0 %v239
    %v567 = vpop.f32.mrb[0].mxu0
    %v568 = vadd.f32 0.0, %v567
    %v569 = vpop.f32.mrb[0].mxu0
    %570 = vdwg.mxu0
    %vm579 = vcmask 1046528
    %v580 = vrot.slane %v324, 1
    %v581 = vrot.slane %v330, 1
    %v582 = vsel %vm579, %v580, %v581
    %v583 = vrot.slane %v326, 1
    %v584 = vrot.slane %v332, 1
    %v585 = vsel %vm579, %v583, %v584
    %v586 = vrot.slane %v336, 1
    %v587 = vsel %vm579, %v581, %v586
    %v588 = vrot.slane %v338, 1
    %v589 = vsel %vm579, %v584, %v588
    %v590 = vrot.slane %v342, 1
    %v591 = vsel %vm579, %v586, %v590
    %v592 = vrot.slane %v344, 1
    %v593 = vsel %vm579, %v588, %v592
    %594 = vrot.lane.b32.xlu0 %v582, 8
    %v595 = vpop.permute.xlu0 %594
    %596 = vrot.lane.b32.xlu0 %v585, 8
    %v597 = vpop.permute.xlu0 %596
    %598 = vrot.lane.b32.xlu0 %v587, 8
    %v599 = vpop.permute.xlu0 %598
    %600 = vrot.lane.b32.xlu0 %v589, 8
    %v601 = vpop.permute.xlu0 %600
    %602 = vrot.lane.b32.xlu0 %v591, 8
    %v603 = vpop.permute.xlu0 %602
    %604 = vrot.lane.b32.xlu0 %v593, 8
    %v605 = vpop.permute.xlu0 %604
    %vm606 = vcmask 64512
    %v607 = vsel %vm606, %v595, %v597
    %v608 = vsel %vm606, %v599, %v601
    %v609 = vsel %vm606, %v603, %v605
    %v613 = vadd.f32 %v324, %v607
    %v614 = vadd.f32 %v330, %v608
    %v615 = vadd.f32 %v336, %v609
    %vm620 = vcmask 1045504
    %v621 = vrot.slane %v326, 2
    %v622 = vrot.slane %v332, 2
    %v623 = vsel %vm620, %v621, %v622
    %v624 = vrot.slane %v431, 2
    %v625 = vrot.slane %v437, 2
    %v626 = vsel %vm620, %v624, %v625
    %v627 = vrot.slane %v338, 2
    %v628 = vsel %vm620, %v622, %v627
    %v629 = vrot.slane %v443, 2
    %v630 = vsel %vm620, %v625, %v629
    %v631 = vrot.slane %v344, 2
    %v632 = vsel %vm620, %v627, %v631
    %v633 = vrot.slane %v449, 2
    %v634 = vsel %vm620, %v629, %v633
    %635 = vrot.lane.b32.xlu0 %v623, 16
    %v636 = vpop.permute.xlu0 %635
    %637 = vrot.lane.b32.xlu0 %v626, 16
    %v638 = vpop.permute.xlu0 %637
    %639 = vrot.lane.b32.xlu0 %v628, 16
    %v640 = vpop.permute.xlu0 %639
    %641 = vrot.lane.b32.xlu0 %v630, 16
    %v642 = vpop.permute.xlu0 %641
    %643 = vrot.lane.b32.xlu0 %v632, 16
    %v644 = vpop.permute.xlu0 %643
    %645 = vrot.lane.b32.xlu0 %v634, 16
    %v646 = vpop.permute.xlu0 %645
    %vm647 = vcmask 130048
    %v648 = vsel %vm647, %v636, %v638
    %v649 = vsel %vm647, %v640, %v642
    %v650 = vsel %vm647, %v644, %v646
    %v654 = vadd.f32 %v613, %v648
    %v655 = vadd.f32 %v614, %v649
    %v656 = vadd.f32 %v615, %v650
    %vm661 = vcmask 1044480
    %v662 = vrot.slane %v431, 3
    %v663 = vrot.slane %v437, 3
    %v664 = vsel %vm661, %v662, %v663
    %v665 = vrot.slane %v433, 3
    %v666 = vrot.slane %v439, 3
    %v667 = vsel %vm661, %v665, %v666
    %v668 = vrot.slane %v443, 3
    %v669 = vsel %vm661, %v663, %v668
    %v670 = vrot.slane %v445, 3
    %v671 = vsel %vm661, %v666, %v670
    %v672 = vrot.slane %v449, 3
    %v673 = vsel %vm661, %v668, %v672
    %v674 = vrot.slane %v451, 3
    %v675 = vsel %vm661, %v670, %v674
    %676 = vrot.lane.b32.xlu0 %v664, 24
    %v677 = vpop.permute.xlu0 %676
    %678 = vrot.lane.b32.xlu0 %v667, 24
    %v679 = vpop.permute.xlu0 %678
    %680 = vrot.lane.b32.xlu0 %v669, 24
    %v681 = vpop.permute.xlu0 %680
    %682 = vrot.lane.b32.xlu0 %v671, 24
    %v683 = vpop.permute.xlu0 %682
    %684 = vrot.lane.b32.xlu0 %v673, 24
    %v685 = vpop.permute.xlu0 %684
    %686 = vrot.lane.b32.xlu0 %v675, 24
    %v687 = vpop.permute.xlu0 %686
    %vm688 = vcmask 195584
    %v689 = vsel %vm688, %v677, %v679
    %v690 = vsel %vm688, %v681, %v683
    %v691 = vsel %vm688, %v685, %v687
    %v695 = vadd.f32 %v654, %v689
    %v696 = vadd.f32 %v655, %v690
    %v697 = vadd.f32 %v656, %v691
    %v702 = vrot.slane %v433, 4
    %v703 = vrot.slane %v439, 4
    %v704 = vsel %vm241, %v702, %v703
    %v705 = vrot.slane %v538, 4
    %v706 = vrot.slane %v543, 4
    %v707 = vsel %vm241, %v705, %v706
    %v708 = vrot.slane %v445, 4
    %v709 = vsel %vm241, %v703, %v708
    %v710 = vrot.slane %v548, 4
    %v711 = vsel %vm241, %v706, %v710
    %v712 = vrot.slane %v451, 4
    %v713 = vsel %vm241, %v708, %v712
    %v714 = vrot.slane %v553, 4
    %v715 = vsel %vm241, %v710, %v714
    %716 = vrot.lane.b32.xlu0 %v704, 32
    %v717 = vpop.permute.xlu0 %716
    %718 = vrot.lane.b32.xlu0 %v707, 32
    %v719 = vpop.permute.xlu0 %718
    %720 = vrot.lane.b32.xlu0 %v709, 32
    %v721 = vpop.permute.xlu0 %720
    %722 = vrot.lane.b32.xlu0 %v711, 32
    %v723 = vpop.permute.xlu0 %722
    %724 = vrot.lane.b32.xlu0 %v713, 32
    %v725 = vpop.permute.xlu0 %724
    %726 = vrot.lane.b32.xlu0 %v715, 32
    %v727 = vpop.permute.xlu0 %726
    %vm728 = vcmask 261120
    %v729 = vsel %vm728, %v717, %v719
    %v730 = vsel %vm728, %v721, %v723
    %v731 = vsel %vm728, %v725, %v727
    %v735 = vadd.f32 %v695, %v729
    %v736 = vadd.f32 %v696, %v730
    %v737 = vadd.f32 %v697, %v731
    %v744 = vrot.slane %v348, 1
    %v745 = vsel %vm579, %v590, %v744
    %v746 = vrot.slane %v350, 1
    %v747 = vsel %vm579, %v592, %v746
    %v748 = vrot.slane %v354, 1
    %v749 = vsel %vm579, %v744, %v748
    %v750 = vrot.slane %v356, 1
    %v751 = vsel %vm579, %v746, %v750
    %v752 = vrot.slane %v360, 1
    %v753 = vsel %vm579, %v748, %v752
    %v754 = vrot.slane %v362, 1
    %v755 = vsel %vm579, %v750, %v754
    %756 = vrot.lane.b32.xlu0 %v745, 8
    %v757 = vpop.permute.xlu0 %756
    %758 = vrot.lane.b32.xlu0 %v747, 8
    %v759 = vpop.permute.xlu0 %758
    %760 = vrot.lane.b32.xlu0 %v749, 8
    %v761 = vpop.permute.xlu0 %760
    %762 = vrot.lane.b32.xlu0 %v751, 8
    %v763 = vpop.permute.xlu0 %762
    %764 = vrot.lane.b32.xlu0 %v753, 8
    %v765 = vpop.permute.xlu0 %764
    %766 = vrot.lane.b32.xlu0 %v755, 8
    %v767 = vpop.permute.xlu0 %766
    %768 = vrot.lane.b32.xlu0 %v752, 8
    %v769 = vpop.permute.xlu0 %768
    %770 = vrot.lane.b32.xlu0 %v754, 8
    %v771 = vpop.permute.xlu0 %770
    %v772 = vsel %vm606, %v757, %v759
    %v773 = vsel %vm606, %v761, %v763
    %v774 = vsel %vm606, %v765, %v767
    %v775 = vsel %vm606, %v769, %v771
    %v780 = vadd.f32 %v342, %v772
    %v781 = vadd.f32 %v348, %v773
    %v782 = vadd.f32 %v354, %v774
    %v783 = vadd.f32 %v360, %v775
    %v787 = vrot.slane %v350, 2
    %v788 = vsel %vm620, %v631, %v787
    %v789 = vrot.slane %v455, 2
    %v790 = vsel %vm620, %v633, %v789
    %v791 = vrot.slane %v356, 2
    %v792 = vsel %vm620, %v787, %v791
    %v793 = vrot.slane %v461, 2
    %v794 = vsel %vm620, %v789, %v793
    %v795 = vrot.slane %v362, 2
    %v796 = vsel %vm620, %v791, %v795
    %v797 = vrot.slane %v467, 2
    %v798 = vsel %vm620, %v793, %v797
    %799 = vrot.lane.b32.xlu0 %v788, 16
    %v800 = vpop.permute.xlu0 %799
    %801 = vrot.lane.b32.xlu0 %v790, 16
    %v802 = vpop.permute.xlu0 %801
    %803 = vrot.lane.b32.xlu0 %v792, 16
    %v804 = vpop.permute.xlu0 %803
    %805 = vrot.lane.b32.xlu0 %v794, 16
    %v806 = vpop.permute.xlu0 %805
    %807 = vrot.lane.b32.xlu0 %v796, 16
    %v808 = vpop.permute.xlu0 %807
    %809 = vrot.lane.b32.xlu0 %v798, 16
    %v810 = vpop.permute.xlu0 %809
    %811 = vrot.lane.b32.xlu0 %v795, 16
    %v812 = vpop.permute.xlu0 %811
    %813 = vrot.lane.b32.xlu0 %v797, 16
    %v814 = vpop.permute.xlu0 %813
    %v815 = vsel %vm647, %v800, %v802
    %v816 = vsel %vm647, %v804, %v806
    %v817 = vsel %vm647, %v808, %v810
    %v818 = vsel %vm647, %v812, %v814
    %v823 = vadd.f32 %v780, %v815
    %v824 = vadd.f32 %v781, %v816
    %v825 = vadd.f32 %v782, %v817
    %v826 = vadd.f32 %v783, %v818
    %v830 = vrot.slane %v455, 3
    %v831 = vsel %vm661, %v672, %v830
    %v832 = vrot.slane %v457, 3
    %v833 = vsel %vm661, %v674, %v832
    %v834 = vrot.slane %v461, 3
    %v835 = vsel %vm661, %v830, %v834
    %v836 = vrot.slane %v463, 3
    %v837 = vsel %vm661, %v832, %v836
    %v838 = vrot.slane %v467, 3
    %v839 = vsel %vm661, %v834, %v838
    %v840 = vrot.slane %v469, 3
    %v841 = vsel %vm661, %v836, %v840
    %842 = vrot.lane.b32.xlu0 %v831, 24
    %v843 = vpop.permute.xlu0 %842
    %844 = vrot.lane.b32.xlu0 %v833, 24
    %v845 = vpop.permute.xlu0 %844
    %846 = vrot.lane.b32.xlu0 %v835, 24
    %v847 = vpop.permute.xlu0 %846
    %848 = vrot.lane.b32.xlu0 %v837, 24
    %v849 = vpop.permute.xlu0 %848
    %850 = vrot.lane.b32.xlu0 %v839, 24
    %v851 = vpop.permute.xlu0 %850
    %852 = vrot.lane.b32.xlu0 %v841, 24
    %v853 = vpop.permute.xlu0 %852
    %854 = vrot.lane.b32.xlu0 %v838, 24
    %v855 = vpop.permute.xlu0 %854
    %856 = vrot.lane.b32.xlu0 %v840, 24
    %v857 = vpop.permute.xlu0 %856
    %v858 = vsel %vm688, %v843, %v845
    %v859 = vsel %vm688, %v847, %v849
    %v860 = vsel %vm688, %v851, %v853
    %v861 = vsel %vm688, %v855, %v857
    %v866 = vadd.f32 %v823, %v858
    %v867 = vadd.f32 %v824, %v859
    %v868 = vadd.f32 %v825, %v860
    %v869 = vadd.f32 %v826, %v861
    %v873 = vrot.slane %v457, 4
    %v874 = vrot.slane %v558, 4
    %v875 = vrot.slane %v463, 4
    %v876 = vsel %vm241, %v873, %v875
    %v877 = vrot.slane %v563, 4
    %v878 = vsel %vm241, %v874, %v877
    %v879 = vrot.slane %v469, 4
    %v880 = vsel %vm241, %v875, %v879
    %v881 = vrot.slane %v568, 4
    %v882 = vsel %vm241, %v877, %v881
    %883 = vrot.lane.b32.xlu0 %v873, 32
    %v884 = vpop.permute.xlu0 %883
    %885 = vrot.lane.b32.xlu0 %v874, 32
    %v886 = vpop.permute.xlu0 %885
    %887 = vrot.lane.b32.xlu0 %v876, 32
    %v888 = vpop.permute.xlu0 %887
    %889 = vrot.lane.b32.xlu0 %v878, 32
    %v890 = vpop.permute.xlu0 %889
    %891 = vrot.lane.b32.xlu0 %v880, 32
    %v892 = vpop.permute.xlu0 %891
    %893 = vrot.lane.b32.xlu0 %v882, 32
    %v894 = vpop.permute.xlu0 %893
    %895 = vrot.lane.b32.xlu0 %v879, 32
    %v896 = vpop.permute.xlu0 %895
    %897 = vrot.lane.b32.xlu0 %v881, 32
    %v898 = vpop.permute.xlu0 %897
    %v899 = vsel %vm728, %v884, %v886
    %v900 = vsel %vm728, %v888, %v890
    %v901 = vsel %vm728, %v892, %v894
    %v902 = vsel %vm728, %v896, %v898
    %v907 = vadd.f32 %v866, %v899
    %v908 = vadd.f32 %v867, %v900
    %v909 = vadd.f32 %v868, %v901
    %v910 = vadd.f32 %v869, %v902
    %v915 = vrot.slane %v907, 4
    %v916 = vrot.slane %v908, 4
    %v917 = vsel %vm241, %v915, %v916
    %v918 = vrot.slane %v909, 4
    %v919 = vsel %vm241, %v916, %v918
    %v920 = vrot.slane %v910, 4
    %v921 = vsel %vm241, %v918, %v920
    %vm925 = vcmask 982016
    %v926 = vsel %vm925, %v735, 0.0
    %v927 = vsel %vm925, %v736, 0.0
    %v928 = vadd.f32 %v926, %v927
    %v929 = vsel %vm925, %v737, 0.0
    %v930 = vadd.f32 %v928, %v929
    %v931 = vsel %vm925, %v917, 0.0
    %v932 = vadd.f32 %v930, %v931
    %v933 = vsel %vm925, %v919, 0.0
    %v934 = vadd.f32 %v932, %v933
    %v935 = vsel %vm925, %v921, 0.0
    %v936 = vadd.f32 %v934, %v935
    %v937 = vrot.slane %v936, 4
    %v938 = vadd.f32 %v936, %v937
    %v939 = vrot.slane %v938, 2
    %v940 = vadd.f32 %v938, %v939
    %v941 = vrot.slane %v940, 1
    %v942 = vadd.f32 %v940, %v941
    %v943 = vmul.f32 %v735, %v735
    %v944 = vmul.f32 %v736, %v736
    %v945 = vmul.f32 %v737, %v737
    %v946 = vmul.f32 %v917, %v917
    %v947 = vmul.f32 %v919, %v919
    %v948 = vmul.f32 %v921, %v921
    %v949 = vsel %vm925, %v943, 0.0
    %v950 = vsel %vm925, %v944, 0.0
    %v951 = vadd.f32 %v949, %v950
    %v952 = vsel %vm925, %v945, 0.0
    %v953 = vadd.f32 %v951, %v952
    %v954 = vsel %vm925, %v946, 0.0
    %v955 = vadd.f32 %v953, %v954
    %v956 = vsel %vm925, %v947, 0.0
    %v957 = vadd.f32 %v955, %v956
    %v958 = vsel %vm925, %v948, 0.0
    %v959 = vadd.f32 %v957, %v958
    %v960 = vrot.slane %v959, 4
    %v961 = vadd.f32 %v959, %v960
    %v962 = vrot.slane %v961, 2
    %v963 = vadd.f32 %v961, %v962
    %v964 = vrot.slane %v963, 1
    %v965 = vadd.f32 %v963, %v964
    %vm966 = vcmask 1040384
    %v967 = vsel %vm966, %v942, %v965
    %v968 = vld [vmem:[#allocation5] sm:$0xff]
    %v969 = vld [vmem:[#allocation5 + $0x8] sm:$0xff]
    %v970 = vld [vmem:[#allocation5 + $0x10] sm:$0xff]
    %v971 = vld [vmem:[#allocation5 + $0x18] sm:$0xff]
    %v972 = vld [vmem:[#allocation5 + $0x20] sm:$0xff]
    %v973 = vld [vmem:[#allocation5 + $0x28] sm:$0xff]
    %v974 = vld [vmem:[#allocation5 + $0x30] sm:$0xff]
    %v975 = vld [vmem:[#allocation5 + $0x38] sm:$0xff]
    %v976 = vld [vmem:[#allocation5 + $0x40] sm:$0xff]
    %v977 = vld [vmem:[#allocation5 + $0x48] sm:$0xff]
    %v978 = vld [vmem:[#allocation5 + $0x50] sm:$0xff]
    %v979 = vld [vmem:[#allocation5 + $0x58] sm:$0xff]
    %v980 = vld [vmem:[#allocation5 + $0x60] sm:$0xff]
    %v981 = vld [vmem:[#allocation5 + $0x68] sm:$0xff]
    %v982 = vld [vmem:[#allocation5 + $0x70] sm:$0xff]
    %v984 = vsel %vm925, %v967, 0
    %986 = vmatprep.subr.mxu0 0.0
    %987 = vmatpush1.msra.mxu0 %v968
    %988 = vmatprep.subr.mxu0 0.0
    %989 = vmatpush1.msra.mxu0 %v969
    %990 = vmatprep.subr.mxu0 0.0
    %991 = vmatpush1.msra.mxu0 %v970
    %992 = vmatprep.subr.mxu0 0.0
    %993 = vmatpush1.msra.mxu0 %v971
    %994 = vmatprep.subr.mxu0 0.0
    %995 = vmatpush1.msra.mxu0 %v972
    %996 = vmatprep.subr.mxu0 0.0
    %997 = vmatpush1.msra.mxu0 %v973
    %998 = vmatprep.subr.mxu0 0.0
    %999 = vmatpush1.msra.mxu0 %v974
    %1000 = vmatprep.subr.mxu0 0.0
    %1001 = vmatpush1.msra.mxu0 %v975
    %1002 = vmatprep.subr.mxu0 0.0
    %1003 = vmatpush1.msra.mxu0 %v976
    %1004 = vmatprep.subr.mxu0 0.0
    %1005 = vmatpush1.msra.mxu0 %v977
    %1006 = vmatprep.subr.mxu0 0.0
    %1007 = vmatpush1.msra.mxu0 %v978
    %1008 = vmatprep.subr.mxu0 0.0
    %1009 = vmatpush1.msra.mxu0 %v979
    %1010 = vmatprep.subr.mxu0 0.0
    %1011 = vmatpush1.msra.mxu0 %v980
    %1012 = vmatprep.subr.mxu0 0.0
    %1013 = vmatpush1.msra.mxu0 %v981
    %1014 = vmatprep.subr.mxu0 0.0
    %1015 = vmatpush1.msra.mxu0 %v982
    %1016 = vmatprep.subr.mxu0 0.0
    %1017 = vmatpush1.msra.mxu0 0.0
    %1018 = vmatprep.subr.mxu0 0.0
    %1019 = vmatpush1.msra.mxu0 0.0
    %1020 = vmatprep.subr.mxu0 0.0
    %1021 = vmatpush1.msra.mxu0 0.0
    %1022 = vmatprep.subr.mxu0 0.0
    %1023 = vmatpush1.msra.mxu0 0.0
    %1024 = vmatprep.subr.mxu0 0.0
    %1025 = vmatpush1.msra.mxu0 0.0
    %1026 = vmatprep.subr.mxu0 0.0
    %1027 = vmatpush1.msra.mxu0 0.0
    %1028 = vmatprep.subr.mxu0 0.0
    %1029 = vmatpush1.msra.mxu0 0.0
    %1030 = vmatprep.subr.mxu0 0.0
    %1031 = vmatpush1.msra.mxu0 0.0
    %1032 = vmatprep.subr.mxu0 0.0
    %1033 = vmatpush1.msra.mxu0 0.0
    %1034 = vmatprep.subr.mxu0 0.0
    %1035 = vmatpush1.msra.mxu0 0.0
    %1036 = vmatprep.subr.mxu0 0.0
    %1037 = vmatpush1.msra.mxu0 0.0
    %1038 = vmatprep.subr.mxu0 0.0
    %1039 = vmatpush1.msra.mxu0 0.0
    %1040 = vmatprep.subr.mxu0 0.0
    %1041 = vmatpush1.msra.mxu0 0.0
    %1042 = vmatprep.subr.mxu0 0.0
    %1043 = vmatpush1.msra.mxu0 0.0
    %1044 = vmatprep.subr.mxu0 0.0
    %1045 = vmatpush1.msra.mxu0 0.0
    %1046 = vmatprep.subr.mxu0 0.0
    %1047 = vmatpush1.msra.mxu0 0.0
    %1048 = vmatprep.subr.mxu0 0.0
    %1049 = vmatpush1.msra.mxu0 0.0
    %1050 = vmatprep.mubr.f32.mxu0 0.0
    %1051 = vmatmul.mubr.f32.gmra.mrb[0].mxu0 %v984
    %v1052 = vpop.f32.mrb[0].mxu0
    %v1053 = vadd.f32 0.0, %v1052
    %v1054 = vpop.f32.mrb[0].mxu0
    %1055 = vdwg.mxu0
    %v1056 = vmul.f32 %v1053, %v1053
    %v1058 = vrot.slane %v1056, 7
    %v1060 = vsub.f32 %v1053, %v1058
    %v1061 = vmax.f32 %v1060, 0.0
    %v1062 = vld [vmem:[#allocation7] sm:$0x1]
    %v1063 = vadd.f32 %v1061, 1e-05
    %v1064 = vrsqrt.pop %v1063
    %v1066 = vrot.slane %v1064, 1
    %v1068 = vmul.f32 %v1062, %v1066
    %v1069 = vld [vmem:[#allocation7 + $0x1] sm:$0x1]
    %v1070 = vmul.f32 %v1053, %v1068
    %v1071 = vsub.f32 %v1069, %v1070
    %v1072 = vlaneseq
    %v1073 = vshrl.u32 %v1072, 7
    %v1074 = vsub.s32 0, %v1073
    %v1075 = vrot.slane %v1068, %v1074
    %v1076 = vmul.f32 %v735, %v1075
    %v1077 = vmul.f32 %v736, %v1075
    %v1078 = vmul.f32 %v737, %v1075
    %v1079 = vmul.f32 %v917, %v1075
    %v1080 = vmul.f32 %v919, %v1075
    %v1081 = vmul.f32 %v921, %v1075
    %v1082 = vlaneseq
    %v1083 = vshrl.u32 %v1082, 7
    %v1084 = vsub.s32 0, %v1083
    %v1085 = vrot.slane %v1071, %v1084
    %v1086 = vadd.f32 %v1076, %v1085
    %v1087 = vadd.f32 %v1077, %v1085
    %v1088 = vadd.f32 %v1078, %v1085
    %v1089 = vadd.f32 %v1079, %v1085
    %v1090 = vadd.f32 %v1080, %v1085
    %v1091 = vadd.f32 %v1081, %v1085
    %v1092 = vmax.f32 %v1086, 0.0
    %v1093 = vmax.f32 %v1087, 0.0
    %v1094 = vmax.f32 %v1088, 0.0
    %v1095 = vmax.f32 %v1089, 0.0
    %v1096 = vmax.f32 %v1090, 0.0
    %v1097 = vmax.f32 %v1091, 0.0
    %1104 = vrot.lane.b32.xlu0 %v1092, 68
    %v1105 = vpop.permute.xlu0 %1104
    %1106 = vrot.lane.b32.xlu0 %v1093, 68
    %v1107 = vpop.permute.xlu0 %1106
    %1108 = vrot.lane.b32.xlu0 %v1094, 68
    %v1109 = vpop.permute.xlu0 %1108
    %1110 = vrot.lane.b32.xlu0 %v1095, 68
    %v1111 = vpop.permute.xlu0 %1110
    %1112 = vrot.lane.b32.xlu0 %v1096, 68
    %v1113 = vpop.permute.xlu0 %1112
    %1114 = vrot.lane.b32.xlu0 %v1097, 68
    %v1115 = vpop.permute.xlu0 %1114
    %v1122 = vmax.f32 %v1092, %v1105
    %v1123 = vmax.f32 %v1093, %v1107
    %v1124 = vmax.f32 %v1094, %v1109
    %v1125 = vmax.f32 %v1095, %v1111
    %v1126 = vmax.f32 %v1096, %v1113
    %v1127 = vmax.f32 %v1097, %v1115
    %v1128 = vld [vmem:[#allocation8] sm:$0xff]
    %v1129 = vld [vmem:[#allocation8 + $0x8] sm:$0xff]
    %v1130 = vld [vmem:[#allocation8 + $0x10] sm:$0xff]
    %vm1131 = vcmask 392192
    %v1133 = vsel %vm1131, %v1128, 0
    %v1136 = vsel %vm1131, %v1129, 0
    %v1139 = vsel %vm1131, %v1130, 0
    %1141 = vmatprep.subr.mxu0 0.0
    %1142 = vmatpush1.msra.mxu0 %v1122
    %1143 = vmatprep.subr.mxu0 0.0
    %1144 = vmatpush1.msra.mxu0 %v1123
    %1145 = vmatprep.subr.mxu0 0.0
    %1146 = vmatpush1.msra.mxu0 %v1124
    %1147 = vmatprep.subr.mxu0 0.0
    %1148 = vmatpush1.msra.mxu0 %v1125
    %1149 = vmatprep.subr.mxu0 0.0
    %1150 = vmatpush1.msra.mxu0 %v1126
    %1151 = vmatprep.subr.mxu0 0.0
    %1152 = vmatpush1.msra.mxu0 %v1127
    %1153 = vmatprep.subr.mxu0 0.0
    %1154 = vmatpush1.msra.mxu0 0.0
    %1155 = vmatprep.subr.mxu0 0.0
    %1156 = vmatpush1.msra.mxu0 0.0
    %1157 = vmatprep.subr.mxu0 0.0
    %1158 = vmatpush1.msra.mxu0 0.0
    %1159 = vmatprep.subr.mxu0 0.0
    %1160 = vmatpush1.msra.mxu0 0.0
    %1161 = vmatprep.subr.mxu0 0.0
    %1162 = vmatpush1.msra.mxu0 0.0
    %1163 = vmatprep.subr.mxu0 0.0
    %1164 = vmatpush1.msra.mxu0 0.0
    %1165 = vmatprep.subr.mxu0 0.0
    %1166 = vmatpush1.msra.mxu0 0.0
    %1167 = vmatprep.subr.mxu0 0.0
    %1168 = vmatpush1.msra.mxu0 0.0
    %1169 = vmatprep.subr.mxu0 0.0
    %1170 = vmatpush1.msra.mxu0 0.0
    %1171 = vmatprep.subr.mxu0 0.0
    %1172 = vmatpush1.msra.mxu0 0.0
    %1173 = vmatprep.subr.mxu0 0.0
    %1174 = vmatpush1.msra.mxu0 0.0
    %1175 = vmatprep.subr.mxu0 0.0
    %1176 = vmatpush1.msra.mxu0 0.0
    %1177 = vmatprep.subr.mxu0 0.0
    %1178 = vmatpush1.msra.mxu0 0.0
    %1179 = vmatprep.subr.mxu0 0.0
    %1180 = vmatpush1.msra.mxu0 0.0
    %1181 = vmatprep.subr.mxu0 0.0
    %1182 = vmatpush1.msra.mxu0 0.0
    %1183 = vmatprep.subr.mxu0 0.0
    %1184 = vmatpush1.msra.mxu0 0.0
    %1185 = vmatprep.subr.mxu0 0.0
    %1186 = vmatpush1.msra.mxu0 0.0
    %1187 = vmatprep.subr.mxu0 0.0
    %1188 = vmatpush1.msra.mxu0 0.0
    %1189 = vmatprep.subr.mxu0 0.0
    %1190 = vmatpush1.msra.mxu0 0.0
    %1191 = vmatprep.subr.mxu0 0.0
    %1192 = vmatpush1.msra.mxu0 0.0
    %1193 = vmatprep.subr.mxu0 0.0
    %1194 = vmatpush1.msra.mxu0 0.0
    %1195 = vmatprep.subr.mxu0 0.0
    %1196 = vmatpush1.msra.mxu0 0.0
    %1197 = vmatprep.subr.mxu0 0.0
    %1198 = vmatpush1.msra.mxu0 0.0
    %1199 = vmatprep.subr.mxu0 0.0
    %1200 = vmatpush1.msra.mxu0 0.0
    %1201 = vmatprep.subr.mxu0 0.0
    %1202 = vmatpush1.msra.mxu0 0.0
    %1203 = vmatprep.subr.mxu0 0.0
    %1204 = vmatpush1.msra.mxu0 0.0
    %1205 = vmatprep.mubr.f32.mxu0 0.0
    %1206 = vmatmul.mubr.f32.gmra.mrb[0].mxu0 %v1133
    %v1207 = vpop.f32.mrb[0].mxu0
    %v1208 = vadd.f32 0.0, %v1207
    %v1209 = vpop.f32.mrb[0].mxu0
    %1210 = vmatprep.mubr.f32.mxu0 0.0
    %1211 = vmatmul.mubr.f32.gmra.mrb[0].mxu0 %v1136
    %v1212 = vpop.f32.mrb[0].mxu0
    %v1213 = vadd.f32 0.0, %v1212
    %v1214 = vpop.f32.mrb[0].mxu0
    %1215 = vmatprep.mubr.f32.mxu0 0.0
    %1216 = vmatmul.mubr.f32.gmra.mrb[0].mxu0 %v1139
    %v1217 = vpop.f32.mrb[0].mxu0
    %v1218 = vadd.f32 0.0, %v1217
    %v1219 = vpop.f32.mrb[0].mxu0
    %1220 = vdwg.mxu0
    %v1221 = vld [vmem:[#allocation10] sm:$0xff]
    %v1222 = vld [vmem:[#allocation10 + $0x8] sm:$0xff]
    %v1223 = vld [vmem:[#allocation10 + $0x10] sm:$0xff]
    %v1225 = vsel %vm1131, %v1221, 0
    %v1228 = vsel %vm1131, %v1222, 0
    %v1231 = vsel %vm1131, %v1223, 0
    %1233 = vmatprep.subr.mxu0 0.0
    %1234 = vmatpush1.msra.mxu0 %v1122
    %1235 = vmatprep.subr.mxu0 0.0
    %1236 = vmatpush1.msra.mxu0 %v1123
    %1237 = vmatprep.subr.mxu0 0.0
    %1238 = vmatpush1.msra.mxu0 %v1124
    %1239 = vmatprep.subr.mxu0 0.0
    %1240 = vmatpush1.msra.mxu0 %v1125
    %1241 = vmatprep.subr.mxu0 0.0
    %1242 = vmatpush1.msra.mxu0 %v1126
    %1243 = vmatprep.subr.mxu0 0.0
    %1244 = vmatpush1.msra.mxu0 %v1127
    %1245 = vmatprep.subr.mxu0 0.0
    %1246 = vmatpush1.msra.mxu0 0.0
    %1247 = vmatprep.subr.mxu0 0.0
    %1248 = vmatpush1.msra.mxu0 0.0
    %1249 = vmatprep.subr.mxu0 0.0
    %1250 = vmatpush1.msra.mxu0 0.0
    %1251 = vmatprep.subr.mxu0 0.0
    %1252 = vmatpush1.msra.mxu0 0.0
    %1253 = vmatprep.subr.mxu0 0.0
    %1254 = vmatpush1.msra.mxu0 0.0
    %1255 = vmatprep.subr.mxu0 0.0
    %1256 = vmatpush1.msra.mxu0 0.0
    %1257 = vmatprep.subr.mxu0 0.0
    %1258 = vmatpush1.msra.mxu0 0.0
    %1259 = vmatprep.subr.mxu0 0.0
    %1260 = vmatpush1.msra.mxu0 0.0
    %1261 = vmatprep.subr.mxu0 0.0
    %1262 = vmatpush1.msra.mxu0 0.0
    %1263 = vmatprep.subr.mxu0 0.0
    %1264 = vmatpush1.msra.mxu0 0.0
    %1265 = vmatprep.subr.mxu0 0.0
    %1266 = vmatpush1.msra.mxu0 0.0
    %1267 = vmatprep.subr.mxu0 0.0
    %1268 = vmatpush1.msra.mxu0 0.0
    %1269 = vmatprep.subr.mxu0 0.0
    %1270 = vmatpush1.msra.mxu0 0.0
    %1271 = vmatprep.subr.mxu0 0.0
    %1272 = vmatpush1.msra.mxu0 0.0
    %1273 = vmatprep.subr.mxu0 0.0
    %1274 = vmatpush1.msra.mxu0 0.0
    %1275 = vmatprep.subr.mxu0 0.0
    %1276 = vmatpush1.msra.mxu0 0.0
    %1277 = vmatprep.subr.mxu0 0.0
    %1278 = vmatpush1.msra.mxu0 0.0
    %1279 = vmatprep.subr.mxu0 0.0
    %1280 = vmatpush1.msra.mxu0 0.0
    %1281 = vmatprep.subr.mxu0 0.0
    %1282 = vmatpush1.msra.mxu0 0.0
    %1283 = vmatprep.subr.mxu0 0.0
    %1284 = vmatpush1.msra.mxu0 0.0
    %1285 = vmatprep.subr.mxu0 0.0
    %1286 = vmatpush1.msra.mxu0 0.0
    %1287 = vmatprep.subr.mxu0 0.0
    %1288 = vmatpush1.msra.mxu0 0.0
    %1289 = vmatprep.subr.mxu0 0.0
    %1290 = vmatpush1.msra.mxu0 0.0
    %1291 = vmatprep.subr.mxu0 0.0
    %1292 = vmatpush1.msra.mxu0 0.0
    %1293 = vmatprep.subr.mxu0 0.0
    %1294 = vmatpush1.msra.mxu0 0.0
    %1295 = vmatprep.subr.mxu0 0.0
    %1296 = vmatpush1.msra.mxu0 0.0
    %1297 = vmatprep.mubr.f32.mxu0 0.0
    %1298 = vmatmul.mubr.f32.gmra.mrb[0].mxu0 %v1225
    %v1299 = vpop.f32.mrb[0].mxu0
    %v1300 = vadd.f32 0.0, %v1299
    %v1301 = vpop.f32.mrb[0].mxu0
    %1302 = vmatprep.mubr.f32.mxu0 0.0
    %1303 = vmatmul.mubr.f32.gmra.mrb[0].mxu0 %v1228
    %v1304 = vpop.f32.mrb[0].mxu0
    %v1305 = vadd.f32 0.0, %v1304
    %v1306 = vpop.f32.mrb[0].mxu0
    %1307 = vmatprep.mubr.f32.mxu0 0.0
    %1308 = vmatmul.mubr.f32.gmra.mrb[0].mxu0 %v1231
    %v1309 = vpop.f32.mrb[0].mxu0
    %v1310 = vadd.f32 0.0, %v1309
    %v1311 = vpop.f32.mrb[0].mxu0
    %1312 = vdwg.mxu0
    %v1313 = vmax.f32 %v1208, %v1300
    %v1314 = vmax.f32 %v1213, %v1305
    %v1315 = vmax.f32 %v1218, %v1310
    %v1316 = vld [vmem:[#allocation11] sm:$0xff]
    %v1317 = vld [vmem:[#allocation11 + $0x8] sm:$0xff]
    %v1318 = vld [vmem:[#allocation11 + $0x10] sm:$0xff]
    %v1319 = vld [vmem:[#allocation11 + $0x18] sm:$0xff]
    %v1320 = vld [vmem:[#allocation11 + $0x20] sm:$0xff]
    %v1321 = vld [vmem:[#allocation11 + $0x28] sm:$0xff]
    %v1322 = vld [vmem:[#allocation11 + $0x30] sm:$0xff]
    %v1323 = vld [vmem:[#allocation11 + $0x38] sm:$0xff]
    %v1324 = vld [vmem:[#allocation11 + $0x40] sm:$0xff]
    %v1325 = vld [vmem:[#allocation11 + $0x48] sm:$0xff]
    %v1326 = vld [vmem:[#allocation11 + $0x50] sm:$0xff]
    %v1327 = vld [vmem:[#allocation11 + $0x58] sm:$0xff]
    %v1328 = vld [vmem:[#allocation11 + $0x60] sm:$0xff]
    %v1329 = vld [vmem:[#allocation11 + $0x68] sm:$0xff]
    %v1330 = vld [vmem:[#allocation11 + $0x70] sm:$0xff]
    %v1331 = vld [vmem:[#allocation11 + $0x78] sm:$0xff]
    %v1332 = vld [vmem:[#allocation11 + $0x80] sm:$0xff]
    %v1333 = vld [vmem:[#allocation11 + $0x88] sm:$0xff]
    %v1334 = vld [vmem:[#allocation11 + $0x90] sm:$0xff]
    %v1335 = vld [vmem:[#allocation11 + $0x98] sm:$0xff]
    %v1336 = vld [vmem:[#allocation11 + $0xa0] sm:$0xff]
    %v1337 = vld [vmem:[#allocation11 + $0xa8] sm:$0xff]
    %v1338 = vld [vmem:[#allocation11 + $0xb0] sm:$0xff]
    %v1339 = vld [vmem:[#allocation11 + $0xb8] sm:$0xff]
    %v1340 = vld [vmem:[#allocation11 + $0xc0] sm:$0xff]
    %v1341 = vld [vmem:[#allocation11 + $0xc8] sm:$0xff]
    %v1342 = vld [vmem:[#allocation11 + $0xd0] sm:$0xff]
    %v1343 = vld [vmem:[#allocation11 + $0xd8] sm:$0xff]
    %v1344 = vld [vmem:[#allocation11 + $0xe0] sm:$0xf]
    %v1345 = vld [vmem:[#allocation11 + $0xe8] sm:$0xf]
    %v1346 = vld [vmem:[#allocation11 + $0xf0] sm:$0xf]
    %v1347 = vld [vmem:[#allocation11 + $0xf8] sm:$0xf]
    %vm1348 = vcmask 490496
    %v1350 = vsel %vm1348, %v1313, 0
    %v1353 = vsel %vm1348, %v1314, 0
    %v1356 = vsel %vm1348, %v1315, 0
    %v1359 = vsel %vm241, %v1344, 0
    %v1362 = vsel %vm241, %v1345, 0
    %v1365 = vsel %vm241, %v1346, 0
    %v1368 = vsel %vm241, %v1347, 0
    %1370 = vmatprep.subr.mxu0 %v1317
    %1371 = vmatpush1.msra.mxu0 %v1316
    %1372 = vmatprep.subr.mxu0 %v1321
    %1373 = vmatpush1.msra.mxu0 %v1320
    %1374 = vmatprep.subr.mxu0 %v1325
    %1375 = vmatpush1.msra.mxu0 %v1324
    %1376 = vmatprep.subr.mxu0 %v1329
    %1377 = vmatpush1.msra.mxu0 %v1328
    %1378 = vmatprep.subr.mxu0 %v1333
    %1379 = vmatpush1.msra.mxu0 %v1332
    %1380 = vmatprep.subr.mxu0 %v1337
    %1381 = vmatpush1.msra.mxu0 %v1336
    %1382 = vmatprep.subr.mxu0 %v1341
    %1383 = vmatpush1.msra.mxu0 %v1340
    %1384 = vmatprep.subr.mxu0 %v1362
    %1385 = vmatpush1.msra.mxu0 %v1359
    %1386 = vmatprep.subr.mxu0 0.0
    %1387 = vmatpush1.msra.mxu0 0.0
    %1388 = vmatprep.subr.mxu0 0.0
    %1389 = vmatpush1.msra.mxu0 0.0
    %1390 = vmatprep.subr.mxu0 0.0
    %1391 = vmatpush1.msra.mxu0 0.0
    %1392 = vmatprep.subr.mxu0 0.0
    %1393 = vmatpush1.msra.mxu0 0.0
    %1394 = vmatprep.subr.mxu0 0.0
    %1395 = vmatpush1.msra.mxu0 0.0
    %1396 = vmatprep.subr.mxu0 0.0
    %1397 = vmatpush1.msra.mxu0 0.0
    %1398 = vmatprep.subr.mxu0 0.0
    %1399 = vmatpush1.msra.mxu0 0.0
    %1400 = vmatprep.subr.mxu0 0.0
    %1401 = vmatpush1.msra.mxu0 0.0
    %1402 = vmatprep.subr.mxu0 0.0
    %1403 = vmatpush1.msra.mxu0 0.0
    %1404 = vmatprep.subr.mxu0 0.0
    %1405 = vmatpush1.msra.mxu0 0.0
    %1406 = vmatprep.subr.mxu0 0.0
    %1407 = vmatpush1.msra.mxu0 0.0
    %1408 = vmatprep.subr.mxu0 0.0
    %1409 = vmatpush1.msra.mxu0 0.0
    %1410 = vmatprep.subr.mxu0 0.0
    %1411 = vmatpush1.msra.mxu0 0.0
    %1412 = vmatprep.subr.mxu0 0.0
    %1413 = vmatpush1.msra.mxu0 0.0
    %1414 = vmatprep.subr.mxu0 0.0
    %1415 = vmatpush1.msra.mxu0 0.0
    %1416 = vmatprep.subr.mxu0 0.0
    %1417 = vmatpush1.msra.mxu0 0.0
    %1418 = vmatprep.subr.mxu0 0.0
    %1419 = vmatpush1.msra.mxu0 0.0
    %1420 = vmatprep.subr.mxu0 0.0
    %1421 = vmatpush1.msra.mxu0 0.0
    %1422 = vmatprep.subr.mxu0 0.0
    %1423 = vmatpush1.msra.mxu0 0.0
    %1424 = vmatprep.subr.mxu0 0.0
    %1425 = vmatpush1.msra.mxu0 0.0
    %1426 = vmatprep.subr.mxu0 0.0
    %1427 = vmatpush1.msra.mxu0 0.0
    %1428 = vmatprep.subr.mxu0 0.0
    %1429 = vmatpush1.msra.mxu0 0.0
    %1430 = vmatprep.subr.mxu0 0.0
    %1431 = vmatpush1.msra.mxu0 0.0
    %1432 = vmatprep.subr.mxu0 0.0
    %1433 = vmatpush1.msra.mxu0 0.0
    %1434 = vmatprep.mubr.f32.mxu0 0.0
    %1435 = vmatmul.mubr.f32.gmra.mrb[0].mxu0 %v1350
    %v1436 = vpop.f32.mrb[0].mxu0
    %v1437 = vadd.f32 0.0, %v1436
    %v1438 = vpop.f32.mrb[0].mxu0
    %v1439 = vadd.f32 0.0, %v1438
    %1440 = vmatprep.mubr.f32.mxu0 0.0
    %1441 = vmatmul.mubr.f32.gmra.mrb[0].mxu0 %v1353
    %v1442 = vpop.f32.mrb[0].mxu0
    %v1443 = vadd.f32 0.0, %v1442
    %v1444 = vpop.f32.mrb[0].mxu0
    %v1445 = vadd.f32 0.0, %v1444
    %1446 = vmatprep.mubr.f32.mxu0 0.0
    %1447 = vmatmul.mubr.f32.gmra.mrb[0].mxu0 %v1356
    %v1448 = vpop.f32.mrb[0].mxu0
    %v1449 = vadd.f32 0.0, %v1448
    %v1450 = vpop.f32.mrb[0].mxu0
    %v1451 = vadd.f32 0.0, %v1450
    %1452 = vdwg.mxu0
    %1453 = vmatprep.subr.mxu0 %v1319
    %1454 = vmatpush1.msra.mxu0 %v1318
    %1455 = vmatprep.subr.mxu0 %v1323
    %1456 = vmatpush1.msra.mxu0 %v1322
    %1457 = vmatprep.subr.mxu0 %v1327
    %1458 = vmatpush1.msra.mxu0 %v1326
    %1459 = vmatprep.subr.mxu0 %v1331
    %1460 = vmatpush1.msra.mxu0 %v1330
    %1461 = vmatprep.subr.mxu0 %v1335
    %1462 = vmatpush1.msra.mxu0 %v1334
    %1463 = vmatprep.subr.mxu0 %v1339
    %1464 = vmatpush1.msra.mxu0 %v1338
    %1465 = vmatprep.subr.mxu0 %v1343
    %1466 = vmatpush1.msra.mxu0 %v1342
    %1467 = vmatprep.subr.mxu0 %v1368
    %1468 = vmatpush1.msra.mxu0 %v1365
    %1469 = vmatprep.subr.mxu0 0.0
    %1470 = vmatpush1.msra.mxu0 0.0
    %1471 = vmatprep.subr.mxu0 0.0
    %1472 = vmatpush1.msra.mxu0 0.0
    %1473 = vmatprep.subr.mxu0 0.0
    %1474 = vmatpush1.msra.mxu0 0.0
    %1475 = vmatprep.subr.mxu0 0.0
    %1476 = vmatpush1.msra.mxu0 0.0
    %1477 = vmatprep.subr.mxu0 0.0
    %1478 = vmatpush1.msra.mxu0 0.0
    %1479 = vmatprep.subr.mxu0 0.0
    %1480 = vmatpush1.msra.mxu0 0.0
    %1481 = vmatprep.subr.mxu0 0.0
    %1482 = vmatpush1.msra.mxu0 0.0
    %1483 = vmatprep.subr.mxu0 0.0
    %1484 = vmatpush1.msra.mxu0 0.0
    %1485 = vmatprep.subr.mxu0 0.0
    %1486 = vmatpush1.msra.mxu0 0.0
    %1487 = vmatprep.subr.mxu0 0.0
    %1488 = vmatpush1.msra.mxu0 0.0
    %1489 = vmatprep.subr.mxu0 0.0
    %1490 = vmatpush1.msra.mxu0 0.0
    %1491 = vmatprep.subr.mxu0 0.0
    %1492 = vmatpush1.msra.mxu0 0.0
    %1493 = vmatprep.subr.mxu0 0.0
    %1494 = vmatpush1.msra.mxu0 0.0
    %1495 = vmatprep.subr.mxu0 0.0
    %1496 = vmatpush1.msra.mxu0 0.0
    %1497 = vmatprep.subr.mxu0 0.0
    %1498 = vmatpush1.msra.mxu0 0.0
    %1499 = vmatprep.subr.mxu0 0.0
    %1500 = vmatpush1.msra.mxu0 0.0
    %1501 = vmatprep.subr.mxu0 0.0
    %1502 = vmatpush1.msra.mxu0 0.0
    %1503 = vmatprep.subr.mxu0 0.0
    %1504 = vmatpush1.msra.mxu0 0.0
    %1505 = vmatprep.subr.mxu0 0.0
    %1506 = vmatpush1.msra.mxu0 0.0
    %1507 = vmatprep.subr.mxu0 0.0
    %1508 = vmatpush1.msra.mxu0 0.0
    %1509 = vmatprep.subr.mxu0 0.0
    %1510 = vmatpush1.msra.mxu0 0.0
    %1511 = vmatprep.subr.mxu0 0.0
    %1512 = vmatpush1.msra.mxu0 0.0
    %1513 = vmatprep.subr.mxu0 0.0
    %1514 = vmatpush1.msra.mxu0 0.0
    %1515 = vmatprep.subr.mxu0 0.0
    %1516 = vmatpush1.msra.mxu0 0.0
    %1517 = vmatprep.mubr.f32.mxu0 0.0
    %1518 = vmatmul.mubr.f32.gmra.mrb[0].mxu0 %v1350
    %v1519 = vpop.f32.mrb[0].mxu0
    %v1520 = vadd.f32 0.0, %v1519
    %v1521 = vpop.f32.mrb[0].mxu0
    %v1522 = vadd.f32 0.0, %v1521
    %1523 = vmatprep.mubr.f32.mxu0 0.0
    %1524 = vmatmul.mubr.f32.gmra.mrb[0].mxu0 %v1353
    %v1525 = vpop.f32.mrb[0].mxu0
    %v1526 = vadd.f32 0.0, %v1525
    %v1527 = vpop.f32.mrb[0].mxu0
    %v1528 = vadd.f32 0.0, %v1527
    %1529 = vmatprep.mubr.f32.mxu0 0.0
    %1530 = vmatmul.mubr.f32.gmra.mrb[0].mxu0 %v1356
    %v1531 = vpop.f32.mrb[0].mxu0
    %v1532 = vadd.f32 0.0, %v1531
    %v1533 = vpop.f32.mrb[0].mxu0
    %v1534 = vadd.f32 0.0, %v1533
    %1535 = vdwg.mxu0
    %v1540 = vrot.slane %v1437, 1
    %v1541 = vrot.slane %v1443, 1
    %v1542 = vsel %vm579, %v1540, %v1541
    %v1543 = vrot.slane %v1439, 1
    %v1544 = vrot.slane %v1445, 1
    %v1545 = vsel %vm579, %v1543, %v1544
    %1546 = vrot.lane.b32.xlu0 %v1542, 48
    %v1547 = vpop.permute.xlu0 %1546
    %1548 = vrot.lane.b32.xlu0 %v1545, 48
    %v1549 = vpop.permute.xlu0 %1548
    %v1550 = vsel %vm1131, %v1547, %v1549
    %v1552 = vadd.f32 %v1437, %v1550
    %v1553 = vrot.slane %v1439, 2
    %v1554 = vrot.slane %v1445, 2
    %v1555 = vsel %vm620, %v1553, %v1554
    %1556 = vrot.lane.b32.xlu0 %v1555, 96
    %v1557 = vpop.permute.xlu0 %1556
    %v1559 = vadd.f32 %v1552, %v1557
    %v1562 = vrot.slane %v1439, 3
    %v1563 = vrot.slane %v1445, 3
    %v1564 = vsel %vm661, %v1562, %v1563
    %v1565 = vrot.slane %v1520, 3
    %v1566 = vrot.slane %v1526, 3
    %v1567 = vsel %vm661, %v1565, %v1566
    %1568 = vrot.lane.b32.xlu0 %v1564, 16
    %v1569 = vpop.permute.xlu0 %1568
    %1570 = vrot.lane.b32.xlu0 %v1567, 16
    %v1571 = vpop.permute.xlu0 %1570
    %v1572 = vsel %vm647, %v1569, %v1571
    %v1574 = vadd.f32 %v1559, %v1572
    %v1577 = vrot.slane %v1520, 4
    %v1578 = vrot.slane %v1526, 4
    %v1579 = vsel %vm241, %v1577, %v1578
    %v1580 = vrot.slane %v1522, 4
    %v1581 = vrot.slane %v1528, 4
    %v1582 = vsel %vm241, %v1580, %v1581
    %1583 = vrot.lane.b32.xlu0 %v1579, 64
    %v1584 = vpop.permute.xlu0 %1583
    %1585 = vrot.lane.b32.xlu0 %v1582, 64
    %v1586 = vpop.permute.xlu0 %1585
    %vm1587 = vcmask 523264
    %v1588 = vsel %vm1587, %v1584, %v1586
    %v1590 = vadd.f32 %v1574, %v1588
    %v1593 = vrot.slane %v1449, 1
    %v1594 = vsel %vm579, %v1541, %v1593
    %v1595 = vrot.slane %v1451, 1
    %v1596 = vsel %vm579, %v1544, %v1595
    %1597 = vrot.lane.b32.xlu0 %v1594, 48
    %v1598 = vpop.permute.xlu0 %1597
    %1599 = vrot.lane.b32.xlu0 %v1596, 48
    %v1600 = vpop.permute.xlu0 %1599
    %1601 = vrot.lane.b32.xlu0 %v1593, 48
    %v1602 = vpop.permute.xlu0 %1601
    %1603 = vrot.lane.b32.xlu0 %v1595, 48
    %v1604 = vpop.permute.xlu0 %1603
    %v1605 = vsel %vm1131, %v1598, %v1600
    %v1606 = vsel %vm1131, %v1602, %v1604
    %v1609 = vadd.f32 %v1443, %v1605
    %v1610 = vadd.f32 %v1449, %v1606
    %v1611 = vrot.slane %v1451, 2
    %v1612 = vsel %vm620, %v1554, %v1611
    %1613 = vrot.lane.b32.xlu0 %v1612, 96
    %v1614 = vpop.permute.xlu0 %1613
    %1615 = vrot.lane.b32.xlu0 %v1611, 96
    %v1616 = vpop.permute.xlu0 %1615
    %v1619 = vadd.f32 %v1609, %v1614
    %v1620 = vadd.f32 %v1610, %v1616
    %v1622 = vrot.slane %v1451, 3
    %v1623 = vsel %vm661, %v1563, %v1622
    %v1624 = vrot.slane %v1532, 3
    %v1625 = vsel %vm661, %v1566, %v1624
    %1626 = vrot.lane.b32.xlu0 %v1623, 16
    %v1627 = vpop.permute.xlu0 %1626
    %1628 = vrot.lane.b32.xlu0 %v1625, 16
    %v1629 = vpop.permute.xlu0 %1628
    %1630 = vrot.lane.b32.xlu0 %v1622, 16
    %v1631 = vpop.permute.xlu0 %1630
    %1632 = vrot.lane.b32.xlu0 %v1624, 16
    %v1633 = vpop.permute.xlu0 %1632
    %v1634 = vsel %vm647, %v1627, %v1629
    %v1635 = vsel %vm647, %v1631, %v1633
    %v1638 = vadd.f32 %v1619, %v1634
    %v1639 = vadd.f32 %v1620, %v1635
    %v1641 = vrot.slane %v1532, 4
    %v1642 = vrot.slane %v1534, 4
    %1643 = vrot.lane.b32.xlu0 %v1641, 64
    %v1644 = vpop.permute.xlu0 %1643
    %1645 = vrot.lane.b32.xlu0 %v1642, 64
    %v1646 = vpop.permute.xlu0 %1645
    %v1647 = vsel %vm1587, %v1644, %v1646
    %v1649 = vadd.f32 %v1638, %v1647
    %v1650 = vadd.f32 %v1639, %v1647
    %v1653 = vrot.slane %v1649, 4
    %v1654 = vrot.slane %v1650, 4
    %v1655 = vsel %vm241, %v1653, %v1654
    %vm1657 = vcmask 654336
    %v1658 = vsel %vm1657, %v1590, 0.0
    %v1659 = vsel %vm1657, %v1655, 0.0
    %v1660 = vadd.f32 %v1658, %v1659
    %v1661 = vrot.slane %v1660, 4
    %v1662 = vadd.f32 %v1660, %v1661
    %v1663 = vrot.slane %v1662, 2
    %v1664 = vadd.f32 %v1662, %v1663
    %v1665 = vrot.slane %v1664, 1
    %v1666 = vadd.f32 %v1664, %v1665
    %v1667 = vmul.f32 %v1590, %v1590
    %v1668 = vmul.f32 %v1655, %v1655
    %v1669 = vsel %vm1657, %v1667, 0.0
    %v1670 = vsel %vm1657, %v1668, 0.0
    %v1671 = vadd.f32 %v1669, %v1670
    %v1672 = vrot.slane %v1671, 4
    %v1673 = vadd.f32 %v1671, %v1672
    %v1674 = vrot.slane %v1673, 2
    %v1675 = vadd.f32 %v1673, %v1674
    %v1676 = vrot.slane %v1675, 1
    %v1677 = vadd.f32 %v1675, %v1676
    %v1678 = vsel %vm966, %v1666, %v1677
    %v1679 = vld [vmem:[#allocation13] sm:$0xff]
    %v1680 = vld [vmem:[#allocation13 + $0x8] sm:$0xff]
    %v1681 = vld [vmem:[#allocation13 + $0x10] sm:$0xff]
    %v1682 = vld [vmem:[#allocation13 + $0x18] sm:$0xff]
    %v1683 = vld [vmem:[#allocation13 + $0x20] sm:$0xff]
    %v1684 = vld [vmem:[#allocation13 + $0x28] sm:$0xff]
    %v1685 = vld [vmem:[#allocation13 + $0x30] sm:$0xff]
    %v1686 = vld [vmem:[#allocation13 + $0x38] sm:$0xff]
    %v1687 = vld [vmem:[#allocation13 + $0x40] sm:$0xff]
    %v1688 = vld [vmem:[#allocation13 + $0x48] sm:$0xff]
    %v1690 = vsel %vm1657, %v1678, 0
    %1692 = vmatprep.subr.mxu0 0.0
    %1693 = vmatpush1.msra.mxu0 %v1679
    %1694 = vmatprep.subr.mxu0 0.0
    %1695 = vmatpush1.msra.mxu0 %v1680
    %1696 = vmatprep.subr.mxu0 0.0
    %1697 = vmatpush1.msra.mxu0 %v1681
    %1698 = vmatprep.subr.mxu0 0.0
    %1699 = vmatpush1.msra.mxu0 %v1682
    %1700 = vmatprep.subr.mxu0 0.0
    %1701 = vmatpush1.msra.mxu0 %v1683
    %1702 = vmatprep.subr.mxu0 0.0
    %1703 = vmatpush1.msra.mxu0 %v1684
    %1704 = vmatprep.subr.mxu0 0.0
    %1705 = vmatpush1.msra.mxu0 %v1685
    %1706 = vmatprep.subr.mxu0 0.0
    %1707 = vmatpush1.msra.mxu0 %v1686
    %1708 = vmatprep.subr.mxu0 0.0
    %1709 = vmatpush1.msra.mxu0 %v1687
    %1710 = vmatprep.subr.mxu0 0.0
    %1711 = vmatpush1.msra.mxu0 %v1688
    %1712 = vmatprep.subr.mxu0 0.0
    %1713 = vmatpush1.msra.mxu0 0.0
    %1714 = vmatprep.subr.mxu0 0.0
    %1715 = vmatpush1.msra.mxu0 0.0
    %1716 = vmatprep.subr.mxu0 0.0
    %1717 = vmatpush1.msra.mxu0 0.0
    %1718 = vmatprep.subr.mxu0 0.0
    %1719 = vmatpush1.msra.mxu0 0.0
    %1720 = vmatprep.subr.mxu0 0.0
    %1721 = vmatpush1.msra.mxu0 0.0
    %1722 = vmatprep.subr.mxu0 0.0
    %1723 = vmatpush1.msra.mxu0 0.0
    %1724 = vmatprep.subr.mxu0 0.0
    %1725 = vmatpush1.msra.mxu0 0.0
    %1726 = vmatprep.subr.mxu0 0.0
    %1727 = vmatpush1.msra.mxu0 0.0
    %1728 = vmatprep.subr.mxu0 0.0
    %1729 = vmatpush1.msra.mxu0 0.0
    %1730 = vmatprep.subr.mxu0 0.0
    %1731 = vmatpush1.msra.mxu0 0.0
    %1732 = vmatprep.subr.mxu0 0.0
    %1733 = vmatpush1.msra.mxu0 0.0
    %1734 = vmatprep.subr.mxu0 0.0
    %1735 = vmatpush1.msra.mxu0 0.0
    %1736 = vmatprep.subr.mxu0 0.0
    %1737 = vmatpush1.msra.mxu0 0.0
    %1738 = vmatprep.subr.mxu0 0.0
    %1739 = vmatpush1.msra.mxu0 0.0
    %1740 = vmatprep.subr.mxu0 0.0
    %1741 = vmatpush1.msra.mxu0 0.0
    %1742 = vmatprep.subr.mxu0 0.0
    %1743 = vmatpush1.msra.mxu0 0.0
    %1744 = vmatprep.subr.mxu0 0.0
    %1745 = vmatpush1.msra.mxu0 0.0
    %1746 = vmatprep.subr.mxu0 0.0
    %1747 = vmatpush1.msra.mxu0 0.0
    %1748 = vmatprep.subr.mxu0 0.0
    %1749 = vmatpush1.msra.mxu0 0.0
    %1750 = vmatprep.subr.mxu0 0.0
    %1751 = vmatpush1.msra.mxu0 0.0
    %1752 = vmatprep.subr.mxu0 0.0
    %1753 = vmatpush1.msra.mxu0 0.0
    %1754 = vmatprep.subr.mxu0 0.0
    %1755 = vmatpush1.msra.mxu0 0.0
    %1756 = vmatprep.mubr.f32.mxu0 0.0
    %1757 = vmatmul.mubr.f32.gmra.mrb[0].mxu0 %v1690
    %v1758 = vpop.f32.mrb[0].mxu0
    %v1759 = vadd.f32 0.0, %v1758
    %v1760 = vpop.f32.mrb[0].mxu0
    %1761 = vdwg.mxu0
    %v1762 = vmul.f32 %v1759, %v1759
    %v1764 = vrot.slane %v1762, 7
    %v1766 = vsub.f32 %v1759, %v1764
    %v1767 = vmax.f32 %v1766, 0.0
    %v1768 = vld [vmem:[#allocation14] sm:$0x1]
    %v1769 = vadd.f32 %v1767, 1e-05
    %v1770 = vrsqrt.pop %v1769
    %v1772 = vrot.slane %v1770, 1
    %v1774 = vmul.f32 %v1768, %v1772
    %v1775 = vld [vmem:[#allocation14 + $0x1] sm:$0x1]
    %v1776 = vmul.f32 %v1759, %v1774
    %v1777 = vsub.f32 %v1775, %v1776
    %v1778 = vlaneseq
    %v1779 = vshrl.u32 %v1778, 7
    %v1780 = vsub.s32 0, %v1779
    %v1781 = vrot.slane %v1774, %v1780
    %v1782 = vmul.f32 %v1590, %v1781
    %v1783 = vmul.f32 %v1655, %v1781
    %v1784 = vlaneseq
    %v1785 = vshrl.u32 %v1784, 7
    %v1786 = vsub.s32 0, %v1785
    %v1787 = vrot.slane %v1777, %v1786
    %v1788 = vadd.f32 %v1782, %v1787
    %v1789 = vadd.f32 %v1783, %v1787
    %v1790 = vmax.f32 %v1788, 0.0
    %v1791 = vmax.f32 %v1789, 0.0
    %1794 = vrot.lane.b32.xlu0 %v1790, 88
    %v1795 = vpop.permute.xlu0 %1794
    %1796 = vrot.lane.b32.xlu0 %v1791, 88
    %v1797 = vpop.permute.xlu0 %1796
    %v1800 = vmax.f32 %v1790, %v1795
    %v1801 = vmax.f32 %v1791, %v1797
    %v1802 = vld [vmem:[%s9] sm:$0xff]
    %v1804 = vsel %vm647, %v1802, 0
    %1806 = vmatprep.subr.mxu0 0.0
    %1807 = vmatpush1.msra.mxu0 %v1800
    %1808 = vmatprep.subr.mxu0 0.0
    %1809 = vmatpush1.msra.mxu0 %v1801
    %1810 = vmatprep.subr.mxu0 0.0
    %1811 = vmatpush1.msra.mxu0 0.0
    %1812 = vmatprep.subr.mxu0 0.0
    %1813 = vmatpush1.msra.mxu0 0.0
    %1814 = vmatprep.subr.mxu0 0.0
    %1815 = vmatpush1.msra.mxu0 0.0
    %1816 = vmatprep.subr.mxu0 0.0
    %1817 = vmatpush1.msra.mxu0 0.0
    %1818 = vmatprep.subr.mxu0 0.0
    %1819 = vmatpush1.msra.mxu0 0.0
    %1820 = vmatprep.subr.mxu0 0.0
    %1821 = vmatpush1.msra.mxu0 0.0
    %1822 = vmatprep.subr.mxu0 0.0
    %1823 = vmatpush1.msra.mxu0 0.0
    %1824 = vmatprep.subr.mxu0 0.0
    %1825 = vmatpush1.msra.mxu0 0.0
    %1826 = vmatprep.subr.mxu0 0.0
    %1827 = vmatpush1.msra.mxu0 0.0
    %1828 = vmatprep.subr.mxu0 0.0
    %1829 = vmatpush1.msra.mxu0 0.0
    %1830 = vmatprep.subr.mxu0 0.0
    %1831 = vmatpush1.msra.mxu0 0.0
    %1832 = vmatprep.subr.mxu0 0.0
    %1833 = vmatpush1.msra.mxu0 0.0
    %1834 = vmatprep.subr.mxu0 0.0
    %1835 = vmatpush1.msra.mxu0 0.0
    %1836 = vmatprep.subr.mxu0 0.0
    %1837 = vmatpush1.msra.mxu0 0.0
    %1838 = vmatprep.subr.mxu0 0.0
    %1839 = vmatpush1.msra.mxu0 0.0
    %1840 = vmatprep.subr.mxu0 0.0
    %1841 = vmatpush1.msra.mxu0 0.0
    %1842 = vmatprep.subr.mxu0 0.0
    %1843 = vmatpush1.msra.mxu0 0.0
    %1844 = vmatprep.subr.mxu0 0.0
    %1845 = vmatpush1.msra.mxu0 0.0
    %1846 = vmatprep.subr.mxu0 0.0
    %1847 = vmatpush1.msra.mxu0 0.0
    %1848 = vmatprep.subr.mxu0 0.0
    %1849 = vmatpush1.msra.mxu0 0.0
    %1850 = vmatprep.subr.mxu0 0.0
    %1851 = vmatpush1.msra.mxu0 0.0
    %1852 = vmatprep.subr.mxu0 0.0
    %1853 = vmatpush1.msra.mxu0 0.0
    %1854 = vmatprep.subr.mxu0 0.0
    %1855 = vmatpush1.msra.mxu0 0.0
    %1856 = vmatprep.subr.mxu0 0.0
    %1857 = vmatpush1.msra.mxu0 0.0
    %1858 = vmatprep.subr.mxu0 0.0
    %1859 = vmatpush1.msra.mxu0 0.0
    %1860 = vmatprep.subr.mxu0 0.0
    %1861 = vmatpush1.msra.mxu0 0.0
    %1862 = vmatprep.subr.mxu0 0.0
    %1863 = vmatpush1.msra.mxu0 0.0
    %1864 = vmatprep.subr.mxu0 0.0
    %1865 = vmatpush1.msra.mxu0 0.0
    %1866 = vmatprep.subr.mxu0 0.0
    %1867 = vmatpush1.msra.mxu0 0.0
    %1868 = vmatprep.subr.mxu0 0.0
    %1869 = vmatpush1.msra.mxu0 0.0
    %1870 = vmatprep.mubr.f32.mxu0 0.0
    %1871 = vmatmul.mubr.f32.gmra.mrb[0].mxu0 %v1804
    %v1872 = vpop.f32.mrb[0].mxu0
    %v1873 = vadd.f32 0.0, %v1872
    %v1874 = vpop.f32.mrb[0].mxu0
    %1875 = vdwg.mxu0
    %v1876 = vld [vmem:[#allocation16] sm:$0xff]
    %v1878 = vsel %vm647, %v1876, 0
    %1880 = vmatprep.subr.mxu0 0.0
    %1881 = vmatpush1.msra.mxu0 %v1800
    %1882 = vmatprep.subr.mxu0 0.0
    %1883 = vmatpush1.msra.mxu0 %v1801
    %1884 = vmatprep.subr.mxu0 0.0
    %1885 = vmatpush1.msra.mxu0 0.0
    %1886 = vmatprep.subr.mxu0 0.0
    %1887 = vmatpush1.msra.mxu0 0.0
    %1888 = vmatprep.subr.mxu0 0.0
    %1889 = vmatpush1.msra.mxu0 0.0
    %1890 = vmatprep.subr.mxu0 0.0
    %1891 = vmatpush1.msra.mxu0 0.0
    %1892 = vmatprep.subr.mxu0 0.0
    %1893 = vmatpush1.msra.mxu0 0.0
    %1894 = vmatprep.subr.mxu0 0.0
    %1895 = vmatpush1.msra.mxu0 0.0
    %1896 = vmatprep.subr.mxu0 0.0
    %1897 = vmatpush1.msra.mxu0 0.0
    %1898 = vmatprep.subr.mxu0 0.0
    %1899 = vmatpush1.msra.mxu0 0.0
    %1900 = vmatprep.subr.mxu0 0.0
    %1901 = vmatpush1.msra.mxu0 0.0
    %1902 = vmatprep.subr.mxu0 0.0
    %1903 = vmatpush1.msra.mxu0 0.0
    %1904 = vmatprep.subr.mxu0 0.0
    %1905 = vmatpush1.msra.mxu0 0.0
    %1906 = vmatprep.subr.mxu0 0.0
    %1907 = vmatpush1.msra.mxu0 0.0
    %1908 = vmatprep.subr.mxu0 0.0
    %1909 = vmatpush1.msra.mxu0 0.0
    %1910 = vmatprep.subr.mxu0 0.0
    %1911 = vmatpush1.msra.mxu0 0.0
    %1912 = vmatprep.subr.mxu0 0.0
    %1913 = vmatpush1.msra.mxu0 0.0
    %1914 = vmatprep.subr.mxu0 0.0
    %1915 = vmatpush1.msra.mxu0 0.0
    %1916 = vmatprep.subr.mxu0 0.0
    %1917 = vmatpush1.msra.mxu0 0.0
    %1918 = vmatprep.subr.mxu0 0.0
    %1919 = vmatpush1.msra.mxu0 0.0
    %1920 = vmatprep.subr.mxu0 0.0
    %1921 = vmatpush1.msra.mxu0 0.0
    %1922 = vmatprep.subr.mxu0 0.0
    %1923 = vmatpush1.msra.mxu0 0.0
    %1924 = vmatprep.subr.mxu0 0.0
    %1925 = vmatpush1.msra.mxu0 0.0
    %1926 = vmatprep.subr.mxu0 0.0
    %1927 = vmatpush1.msra.mxu0 0.0
    %1928 = vmatprep.subr.mxu0 0.0
    %1929 = vmatpush1.msra.mxu0 0.0
    %1930 = vmatprep.subr.mxu0 0.0
    %1931 = vmatpush1.msra.mxu0 0.0
    %1932 = vmatprep.subr.mxu0 0.0
    %1933 = vmatpush1.msra.mxu0 0.0
    %1934 = vmatprep.subr.mxu0 0.0
    %1935 = vmatpush1.msra.mxu0 0.0
    %1936 = vmatprep.subr.mxu0 0.0
    %1937 = vmatpush1.msra.mxu0 0.0
    %1938 = vmatprep.subr.mxu0 0.0
    %1939 = vmatpush1.msra.mxu0 0.0
    %1940 = vmatprep.subr.mxu0 0.0
    %1941 = vmatpush1.msra.mxu0 0.0
    %1942 = vmatprep.subr.mxu0 0.0
    %1943 = vmatpush1.msra.mxu0 0.0
    %1944 = vmatprep.mubr.f32.mxu0 0.0
    %1945 = vmatmul.mubr.f32.gmra.mrb[0].mxu0 %v1878
    %v1946 = vpop.f32.mrb[0].mxu0
    %v1947 = vadd.f32 0.0, %v1946
    %v1948 = vpop.f32.mrb[0].mxu0
    %1949 = vdwg.mxu0
    %v1950 = vmax.f32 %v1873, %v1947
    %v1951 = vld [vmem:[#allocation17] sm:$0xff]
    %v1952 = vld [vmem:[#allocation17 + $0x8] sm:$0xff]
    %v1953 = vld [vmem:[#allocation17 + $0x10] sm:$0xff]
    %v1954 = vld [vmem:[#allocation17 + $0x18] sm:$0xff]
    %v1955 = vld [vmem:[#allocation17 + $0x20] sm:$0xff]
    %v1956 = vld [vmem:[#allocation17 + $0x28] sm:$0xff]
    %v1957 = vld [vmem:[#allocation17 + $0x30] sm:$0xff]
    %v1958 = vld [vmem:[#allocation17 + $0x38] sm:$0xff]
    %v1959 = vld [vmem:[#allocation17 + $0x40] sm:$0xff]
    %v1960 = vld [vmem:[#allocation17 + $0x48] sm:$0xff]
    %v1961 = vld [vmem:[#allocation17 + $0x50] sm:$0xff]
    %v1962 = vld [vmem:[#allocation17 + $0x58] sm:$0xff]
    %v1963 = vld [vmem:[#allocation17 + $0x60] sm:$0xff]
    %v1964 = vld [vmem:[#allocation17 + $0x68] sm:$0xff]
    %v1965 = vld [vmem:[#allocation17 + $0x70] sm:$0xff]
    %v1966 = vld [vmem:[#allocation17 + $0x78] sm:$0xff]
    %v1967 = vld [vmem:[#allocation17 + $0x80] sm:$0xff]
    %v1968 = vld [vmem:[#allocation17 + $0x88] sm:$0xff]
    %v1969 = vld [vmem:[#allocation17 + $0x90] sm:$0xff]
    %v1970 = vld [vmem:[#allocation17 + $0x98] sm:$0xff]
    %vm1971 = vcmask 326656
    %v1973 = vsel %vm1971, %v1950, 0
    %1975 = vmatprep.subr.mxu0 %v1952
    %1976 = vmatpush1.msra.mxu0 %v1951
    %1977 = vmatprep.subr.mxu0 %v1956
    %1978 = vmatpush1.msra.mxu0 %v1955
    %1979 = vmatprep.subr.mxu0 %v1960
    %1980 = vmatpush1.msra.mxu0 %v1959
    %1981 = vmatprep.subr.mxu0 %v1964
    %1982 = vmatpush1.msra.mxu0 %v1963
    %1983 = vmatprep.subr.mxu0 %v1968
    %1984 = vmatpush1.msra.mxu0 %v1967
    %1985 = vmatprep.subr.mxu0 0.0
    %1986 = vmatpush1.msra.mxu0 0.0
    %1987 = vmatprep.subr.mxu0 0.0
    %1988 = vmatpush1.msra.mxu0 0.0
    %1989 = vmatprep.subr.mxu0 0.0
    %1990 = vmatpush1.msra.mxu0 0.0
    %1991 = vmatprep.subr.mxu0 0.0
    %1992 = vmatpush1.msra.mxu0 0.0
    %1993 = vmatprep.subr.mxu0 0.0
    %1994 = vmatpush1.msra.mxu0 0.0
    %1995 = vmatprep.subr.mxu0 0.0
    %1996 = vmatpush1.msra.mxu0 0.0
    %1997 = vmatprep.subr.mxu0 0.0
    %1998 = vmatpush1.msra.mxu0 0.0
    %1999 = vmatprep.subr.mxu0 0.0
    %2000 = vmatpush1.msra.mxu0 0.0
    %2001 = vmatprep.subr.mxu0 0.0
    %2002 = vmatpush1.msra.mxu0 0.0
    %2003 = vmatprep.subr.mxu0 0.0
    %2004 = vmatpush1.msra.mxu0 0.0
    %2005 = vmatprep.subr.mxu0 0.0
    %2006 = vmatpush1.msra.mxu0 0.0
    %2007 = vmatprep.subr.mxu0 0.0
    %2008 = vmatpush1.msra.mxu0 0.0
    %2009 = vmatprep.subr.mxu0 0.0
    %2010 = vmatpush1.msra.mxu0 0.0
    %2011 = vmatprep.subr.mxu0 0.0
    %2012 = vmatpush1.msra.mxu0 0.0
    %2013 = vmatprep.subr.mxu0 0.0
    %2014 = vmatpush1.msra.mxu0 0.0
    %2015 = vmatprep.subr.mxu0 0.0
    %2016 = vmatpush1.msra.mxu0 0.0
    %2017 = vmatprep.subr.mxu0 0.0
    %2018 = vmatpush1.msra.mxu0 0.0
    %2019 = vmatprep.subr.mxu0 0.0
    %2020 = vmatpush1.msra.mxu0 0.0
    %2021 = vmatprep.subr.mxu0 0.0
    %2022 = vmatpush1.msra.mxu0 0.0
    %2023 = vmatprep.subr.mxu0 0.0
    %2024 = vmatpush1.msra.mxu0 0.0
    %2025 = vmatprep.subr.mxu0 0.0
    %2026 = vmatpush1.msra.mxu0 0.0
    %2027 = vmatprep.subr.mxu0 0.0
    %2028 = vmatpush1.msra.mxu0 0.0
    %2029 = vmatprep.subr.mxu0 0.0
    %2030 = vmatpush1.msra.mxu0 0.0
    %2031 = vmatprep.subr.mxu0 0.0
    %2032 = vmatpush1.msra.mxu0 0.0
    %2033 = vmatprep.subr.mxu0 0.0
    %2034 = vmatpush1.msra.mxu0 0.0
    %2035 = vmatprep.subr.mxu0 0.0
    %2036 = vmatpush1.msra.mxu0 0.0
    %2037 = vmatprep.subr.mxu0 0.0
    %2038 = vmatpush1.msra.mxu0 0.0
    %2039 = vmatprep.mubr.f32.mxu0 0.0
    %2040 = vmatmul.mubr.f32.gmra.mrb[0].mxu0 %v1973
    %v2041 = vpop.f32.mrb[0].mxu0
    %v2042 = vadd.f32 0.0, %v2041
    %v2043 = vpop.f32.mrb[0].mxu0
    %v2044 = vadd.f32 0.0, %v2043
    %2045 = vdwg.mxu0
    %2046 = vmatprep.subr.mxu0 %v1954
    %2047 = vmatpush1.msra.mxu0 %v1953
    %2048 = vmatprep.subr.mxu0 %v1958
    %2049 = vmatpush1.msra.mxu0 %v1957
    %2050 = vmatprep.subr.mxu0 %v1962
    %2051 = vmatpush1.msra.mxu0 %v1961
    %2052 = vmatprep.subr.mxu0 %v1966
    %2053 = vmatpush1.msra.mxu0 %v1965
    %2054 = vmatprep.subr.mxu0 %v1970
    %2055 = vmatpush1.msra.mxu0 %v1969
    %2056 = vmatprep.subr.mxu0 0.0
    %2057 = vmatpush1.msra.mxu0 0.0
    %2058 = vmatprep.subr.mxu0 0.0
    %2059 = vmatpush1.msra.mxu0 0.0
    %2060 = vmatprep.subr.mxu0 0.0
    %2061 = vmatpush1.msra.mxu0 0.0
    %2062 = vmatprep.subr.mxu0 0.0
    %2063 = vmatpush1.msra.mxu0 0.0
    %2064 = vmatprep.subr.mxu0 0.0
    %2065 = vmatpush1.msra.mxu0 0.0
    %2066 = vmatprep.subr.mxu0 0.0
    %2067 = vmatpush1.msra.mxu0 0.0
    %2068 = vmatprep.subr.mxu0 0.0
    %2069 = vmatpush1.msra.mxu0 0.0
    %2070 = vmatprep.subr.mxu0 0.0
    %2071 = vmatpush1.msra.mxu0 0.0
    %2072 = vmatprep.subr.mxu0 0.0
    %2073 = vmatpush1.msra.mxu0 0.0
    %2074 = vmatprep.subr.mxu0 0.0
    %2075 = vmatpush1.msra.mxu0 0.0
    %2076 = vmatprep.subr.mxu0 0.0
    %2077 = vmatpush1.msra.mxu0 0.0
    %2078 = vmatprep.subr.mxu0 0.0
    %2079 = vmatpush1.msra.mxu0 0.0
    %2080 = vmatprep.subr.mxu0 0.0
    %2081 = vmatpush1.msra.mxu0 0.0
    %2082 = vmatprep.subr.mxu0 0.0
    %2083 = vmatpush1.msra.mxu0 0.0
    %2084 = vmatprep.subr.mxu0 0.0
    %2085 = vmatpush1.msra.mxu0 0.0
    %2086 = vmatprep.subr.mxu0 0.0
    %2087 = vmatpush1.msra.mxu0 0.0
    %2088 = vmatprep.subr.mxu0 0.0
    %2089 = vmatpush1.msra.mxu0 0.0
    %2090 = vmatprep.subr.mxu0 0.0
    %2091 = vmatpush1.msra.mxu0 0.0
    %2092 = vmatprep.subr.mxu0 0.0
    %2093 = vmatpush1.msra.mxu0 0.0
    %2094 = vmatprep.subr.mxu0 0.0
    %2095 = vmatpush1.msra.mxu0 0.0
    %2096 = vmatprep.subr.mxu0 0.0
    %2097 = vmatpush1.msra.mxu0 0.0
    %2098 = vmatprep.subr.mxu0 0.0
    %2099 = vmatpush1.msra.mxu0 0.0
    %2100 = vmatprep.subr.mxu0 0.0
    %2101 = vmatpush1.msra.mxu0 0.0
    %2102 = vmatprep.subr.mxu0 0.0
    %2103 = vmatpush1.msra.mxu0 0.0
    %2104 = vmatprep.subr.mxu0 0.0
    %2105 = vmatpush1.msra.mxu0 0.0
    %2106 = vmatprep.subr.mxu0 0.0
    %2107 = vmatpush1.msra.mxu0 0.0
    %2108 = vmatprep.subr.mxu0 0.0
    %2109 = vmatpush1.msra.mxu0 0.0
    %2110 = vmatprep.mubr.f32.mxu0 0.0
    %2111 = vmatmul.mubr.f32.gmra.mrb[0].mxu0 %v1973
    %v2112 = vpop.f32.mrb[0].mxu0
    %v2113 = vadd.f32 0.0, %v2112
    %v2114 = vpop.f32.mrb[0].mxu0
    %v2115 = vadd.f32 0.0, %v2114
    %2116 = vdwg.mxu0
    %v2119 = vrot.slane %v2042, 1
    %v2120 = vrot.slane %v2044, 1
    %2121 = vrot.lane.b32.xlu0 %v2119, 28
    %v2122 = vpop.permute.xlu0 %2121
    %2123 = vrot.lane.b32.xlu0 %v2120, 28
    %v2124 = vpop.permute.xlu0 %2123
    %v2125 = vsel %vm219, %v2122, %v2124
    %v2127 = vadd.f32 %v2042, %v2125
    %v2129 = vrot.slane %v2044, 2
    %v2130 = vrot.slane %v2113, 2
    %2131 = vrot.lane.b32.xlu0 %v2129, 56
    %v2132 = vpop.permute.xlu0 %2131
    %2133 = vrot.lane.b32.xlu0 %v2130, 56
    %v2134 = vpop.permute.xlu0 %2133
    %vm2135 = vcmask 457728
    %v2136 = vsel %vm2135, %v2132, %v2134
    %v2138 = vadd.f32 %v2127, %v2136
    %v2140 = vrot.slane %v2113, 3
    %v2141 = vrot.slane %v2115, 3
    %2142 = vrot.lane.b32.xlu0 %v2140, 84
    %v2143 = vpop.permute.xlu0 %2142
    %2144 = vrot.lane.b32.xlu0 %v2141, 84
    %v2145 = vpop.permute.xlu0 %2144
    %vm2146 = vcmask 687104
    %v2147 = vsel %vm2146, %v2143, %v2145
    %v2149 = vadd.f32 %v2138, %v2147
    %v2151 = vrot.slane %v2149, 3
    %v2153 = vsel %vm966, %v2149, %v2151
    %v2154 = vld [vmem:[%s12] sm:$0x1]
    %v2156 = vlaneseq
    %v2157 = vshrl.u32 %v2156, 7
    %v2158 = vsub.s32 0, %v2157
    %v2159 = vrot.slane %v2154, %v2158
    %v2161 = vadd.f32 %v2153, %v2159
    %v2162 = vmax.f32 %v2161, 0.0
    %v2163 = vld [vmem:[%s13] sm:$0xff]
    %v2164 = vld [vmem:[%s13 + $0x8] sm:$0xff]
    %v2165 = vld [vmem:[%s13 + $0x10] sm:$0xff]
    %v2166 = vld [vmem:[%s13 + $0x18] sm:$0xff]
    %v2167 = vld [vmem:[%s13 + $0x20] sm:$0xff]
    %v2168 = vld [vmem:[%s13 + $0x28] sm:$0xff]
    %v2169 = vld [vmem:[%s13 + $0x30] sm:$0xff]
    %v2170 = vld [vmem:[%s13 + $0x38] sm:$0xff]
    %v2171 = vld [vmem:[%s13 + $0x40] sm:$0xff]
    %v2172 = vld [vmem:[%s13 + $0x48] sm:$0xff]
    %v2173 = vld [vmem:[%s13 + $0x50] sm:$0xff]
    %v2174 = vld [vmem:[%s13 + $0x58] sm:$0xff]
    %v2175 = vld [vmem:[%s13 + $0x60] sm:$0xf]
    %v2176 = vld [vmem:[#allocation19] sm:$0x1]
    %v2178 = vlaneseq
    %v2179 = vshrl.u32 %v2178, 7
    %v2180 = vsub.s32 0, %v2179
    %v2181 = vrot.slane %v2176, %v2180
    %vm2183 = vcmask 818176
    %v2185 = vsel %vm2183, %v2162, 0
    %v2188 = vsel %vm241, %v2175, 0
    %2190 = vmatprep.subr.mxu0 0.0
    %2191 = vmatpush1.msra.mxu0 %v2163
    %2192 = vmatprep.subr.mxu0 0.0
    %2193 = vmatpush1.msra.mxu0 %v2164
    %2194 = vmatprep.subr.mxu0 0.0
    %2195 = vmatpush1.msra.mxu0 %v2165
    %2196 = vmatprep.subr.mxu0 0.0
    %2197 = vmatpush1.msra.mxu0 %v2166
    %2198 = vmatprep.subr.mxu0 0.0
    %2199 = vmatpush1.msra.mxu0 %v2167
    %2200 = vmatprep.subr.mxu0 0.0
    %2201 = vmatpush1.msra.mxu0 %v2168
    %2202 = vmatprep.subr.mxu0 0.0
    %2203 = vmatpush1.msra.mxu0 %v2169
    %2204 = vmatprep.subr.mxu0 0.0
    %2205 = vmatpush1.msra.mxu0 %v2170
    %2206 = vmatprep.subr.mxu0 0.0
    %2207 = vmatpush1.msra.mxu0 %v2171
    %2208 = vmatprep.subr.mxu0 0.0
    %2209 = vmatpush1.msra.mxu0 %v2172
    %2210 = vmatprep.subr.mxu0 0.0
    %2211 = vmatpush1.msra.mxu0 %v2173
    %2212 = vmatprep.subr.mxu0 0.0
    %2213 = vmatpush1.msra.mxu0 %v2174
    %2214 = vmatprep.subr.mxu0 0.0
    %2215 = vmatpush1.msra.mxu0 %v2188
    %2216 = vmatprep.subr.mxu0 0.0
    %2217 = vmatpush1.msra.mxu0 0.0
    %2218 = vmatprep.subr.mxu0 0.0
    %2219 = vmatpush1.msra.mxu0 0.0
    %2220 = vmatprep.subr.mxu0 0.0
    %2221 = vmatpush1.msra.mxu0 0.0
    %2222 = vmatprep.subr.mxu0 0.0
    %2223 = vmatpush1.msra.mxu0 0.0
    %2224 = vmatprep.subr.mxu0 0.0
    %2225 = vmatpush1.msra.mxu0 0.0
    %2226 = vmatprep.subr.mxu0 0.0
    %2227 = vmatpush1.msra.mxu0 0.0
    %2228 = vmatprep.subr.mxu0 0.0
    %2229 = vmatpush1.msra.mxu0 0.0
    %2230 = vmatprep.subr.mxu0 0.0
    %2231 = vmatpush1.msra.mxu0 0.0
    %2232 = vmatprep.subr.mxu0 0.0
    %2233 = vmatpush1.msra.mxu0 0.0
    %2234 = vmatprep.subr.mxu0 0.0
    %2235 = vmatpush1.msra.mxu0 0.0
    %2236 = vmatprep.subr.mxu0 0.0
    %2237 = vmatpush1.msra.mxu0 0.0
    %2238 = vmatprep.subr.mxu0 0.0
    %2239 = vmatpush1.msra.mxu0 0.0
    %2240 = vmatprep.subr.mxu0 0.0
    %2241 = vmatpush1.msra.mxu0 0.0
    %2242 = vmatprep.subr.mxu0 0.0
    %2243 = vmatpush1.msra.mxu0 0.0
    %2244 = vmatprep.subr.mxu0 0.0
    %2245 = vmatpush1.msra.mxu0 0.0
    %2246 = vmatprep.subr.mxu0 0.0
    %2247 = vmatpush1.msra.mxu0 0.0
    %2248 = vmatprep.subr.mxu0 0.0
    %2249 = vmatpush1.msra.mxu0 0.0
    %2250 = vmatprep.subr.mxu0 0.0
    %2251 = vmatpush1.msra.mxu0 0.0
    %2252 = vmatprep.subr.mxu0 0.0
    %2253 = vmatpush1.msra.mxu0 0.0
    %2254 = vmatprep.mubr.f32.mxu0 0.0
    %2255 = vmatmul.mubr.f32.gmra.mrb[0].mxu0 %v2185
    %v2256 = vpop.f32.mrb[0].mxu0
    %v2257 = vadd.f32 %v2181, %v2256
    %v2258 = vpop.f32.mrb[0].mxu0
    %2259 = vdwg.mxu0
    %vm2260 = vcmask 74752
    %v2261 = vsel %vm2260, %v2257, -inf
    %2262 = vmax.xlane.f32.xlu0 %v2261
    %v2263 = vpop.xlane.xlu0 %2262
    %v2264 = vsub.f32 %v2257, %v2263
    %v2265 = vmul.f32 %v2264, 1.442695
    %v2266 = vpow.pop %v2265
    %v2267 = vsel %vm2260, %v2266, 0.0
    %2268 = vadd.xlane.f32.xlu0 %v2267
    %v2269 = vpop.xlane.xlu0 %2268
    %v2270 = vlog2.pop %v2269
    %v2271 = vmul.f32 %v2270, 0.6931472
    %v2272 = vsub.f32 %v2264, %v2271
    %2273 = vst.msk [vmem:[#allocation20] sm:$0x3] %vm2260, %v2272
    // Predicated region
    $region106: #{forward.1} parent=1 // pred_check
      _
    $region107: #{forward.1} parent=1 // pred_check_branch
      %2275 = sbr.rel (0) target = $region109
    $region108: #{forward.1} parent=1 // pred_region
      %s2277 = ssub.s32 32, 32
      %2278 = vsyncadd [#allocation4], %s2277
      %s2280 = sshll.u32 [#allocation20], 4
      %s2281 = int_to_ptr.vmem [resolvable:$true] %s2280
      %2283 = dma.vmem_to_hbm [thread:$0]  %s2281, 32, %s15, [#allocation4]
    $region109: #{forward.1} parent=1 // pred_fallthru
      _
    // Predicated region
    $region110: #{forward.1} parent=1 // pred_check
      _
    $region111: #{forward.1} parent=1 // pred_check_branch
      %2285 = sbr.rel (0) target = $region113
    $region112: #{forward.1} parent=1 // pred_region
      %2286 = dma.done [#allocation4], 32
    $region113: #{forward.1} parent=1 // pred_fallthru
      _
    %2287 = vsyncpa [#allocation3], 1
    %2288 = vsyncpa [#allocation6], 1
    %2289 = vsyncpa [#allocation9], 1
    %2290 = vsyncpa [#allocation12], 1
    %2291 = vsyncpa [#allocation15], 1
    %2292 = vsyncpa [#allocation18], 1
    %2293 = vsyncpa [#allocation4], 1

</llo_original>
